<compile_context>
chip_gen: v7x
topology: tpu7x:2x2x1
jax: 0.10.0
libtpu: 0.0.40
codegen_flags: <defaults>
</compile_context>

<pallas_src>
import math
import functools

import jax
import jax.numpy as jnp
from jax.experimental import pallas as pl
from jax.experimental.pallas import tpu as pltpu

HIGHEST = jax.lax.Precision.HIGHEST   # used only by the pure-JAX reference


def _attnhp_kernel(x_ref, pad_ref, am_ref, valid_ref,
                   wq_ref, bq_ref, wk_ref, bk_ref, wv_ref, bv_ref,
                   wout_ref, bout_ref,
                   g1_ref, be1_ref,
                   w1_ref, b1_ref, w2_ref, b2_ref,
                   g2_ref, be2_ref,
                   out_ref,
                   k_sc, v_sc,
                   *, nhead, use_ff, eps, tq):
    qt = pl.program_id(1)

    # ---- K/V projections: computed once per batch element (qt == 0), cached ----
    @pl.when(qt == 0)
    def _():
        xkv = x_ref[0].astype(jnp.bfloat16)                          # (L, D)
        for h in range(nhead):
            k_h = jnp.dot(xkv, wk_ref[h],
                          preferred_element_type=jnp.float32) + bk_ref[h]
            v_h = jnp.dot(xkv, wv_ref[h],
                          preferred_element_type=jnp.float32) + bv_ref[h]
            k_sc[h] = k_h.astype(jnp.bfloat16)
            v_sc[h] = v_h.astype(jnp.bfloat16)

    # ---- query tile: aligned dynamic slice of the resident full-seq block ----
    q_start = pl.multiple_of(qt * tq, 8)
    x_q = x_ref[0, pl.ds(q_start, tq), :]                            # (tq, D) f32
    xq_b = x_q.astype(jnp.bfloat16)

    # ---- Q projection (1/sqrt(d) pre-folded into wq/bq), stacked over heads ----
    q3 = jnp.stack(
        [jnp.dot(xq_b, wq_ref[h], preferred_element_type=jnp.float32) + bq_ref[h]
         for h in range(nhead)], axis=0).astype(jnp.bfloat16)        # (H, tq, D)

    k3 = k_sc[...]                                                   # (H, L, D)  bf16
    v3 = v_sc[...]                                                   # (H, L, dv) bf16

    # ---- attention, batched over heads ----
    scores = jnp.einsum("hqd,hkd->hqk", q3, k3,
                        preferred_element_type=jnp.float32)          # (H, tq, L)
    scores = scores + am_ref[...] + pad_ref[...]                     # additive masks
    m = jnp.max(scores, axis=-1, keepdims=True)
    e = jnp.exp(scores - m)
    p = e * pl.reciprocal(jnp.sum(e, axis=-1, keepdims=True), approx=True)
    att = jnp.einsum("hqk,hkv->hqv", p.astype(jnp.bfloat16), v3,
                     preferred_element_type=jnp.float32)             # (H, tq, dv)

    # ---- out_proj: sum_h att[h] @ wout[h] (batched matmul + head reduction) ----
    proj = jnp.einsum("hqv,hvd->hqd", att.astype(jnp.bfloat16), wout_ref[...],
                      preferred_element_type=jnp.float32)            # (H, tq, D)
    res = jnp.sum(proj, axis=0) + bout_ref[...]                      # (tq, D)
    res = res * valid_ref[0]                                         # zero all-invalid rows

    # ---- residual + LayerNorm 1 ----
    h1 = x_q + res
    mu = jnp.mean(h1, axis=-1, keepdims=True)
    var = jnp.mean((h1 - mu) ** 2, axis=-1, keepdims=True)
    h1 = (h1 - mu) * jax.lax.rsqrt(var + eps) * g1_ref[...] + be1_ref[...]

    if use_ff:
        # ---- feed-forward + residual + LayerNorm 2 ----
        f = jnp.dot(h1.astype(jnp.bfloat16), w1_ref[...],
                    preferred_element_type=jnp.float32) + b1_ref[...]
        f = jnp.maximum(f, 0.0)
        f = jnp.dot(f.astype(jnp.bfloat16), w2_ref[...],
                    preferred_element_type=jnp.float32) + b2_ref[...]
        y = h1 + f
        mu2 = jnp.mean(y, axis=-1, keepdims=True)
        var2 = jnp.mean((y - mu2) ** 2, axis=-1, keepdims=True)
        y = (y - mu2) * jax.lax.rsqrt(var2 + eps) * g2_ref[...] + be2_ref[...]
    else:
        y = h1

    out_ref[0] = y


def _const_spec(arr):
    nd = arr.ndim
    return pl.BlockSpec(arr.shape, lambda b, qt, _nd=nd: (0,) * _nd)


def attnhp_transformer_layer(src, mask, attn_mask, params, *,
                             nhead, dim_value, ninf=-1e6, eps=1e-5,
                             use_ff=True, q_tile=128):
    """src: (B, L, D) f32; mask: (B, L) bool (1 = padding); attn_mask: (L, L) bool."""
    B, L, D = src.shape
    dv = dim_value
    tq = L if L <= q_tile else q_tile
    assert tq == L or (tq % 8 == 0 and L % tq == 0), \
        "query tile must equal L or be a multiple of 8 dividing L"
    n_qt = pl.cdiv(L, tq)

    # ---- precompute masks: small additive biases + per-query-row valid flag ----
    pad = mask.astype(bool)                                          # (B, L)
    am = attn_mask.astype(bool)                                      # (L, L)
    pad_bias = jnp.where(pad, ninf, 0.0).astype(jnp.bfloat16).reshape(B, 1, L)
    am_bias = jnp.where(am, ninf, 0.0).astype(jnp.bfloat16)          # (L, L)
    # row i of batch b is valid iff exists key j with (not pad[b,j]) & (not am[i,j])
    valid_cnt = jnp.einsum("ij,bj->bi",
                           (~am).astype(jnp.float32), (~pad).astype(jnp.float32))
    row_valid = (valid_cnt > 0).astype(jnp.float32)[..., None]       # (B, L, 1)

    # ---- split in_proj weights per head; fold 1/sqrt(D) into Q ----
    win, bin_ = params["win"], params["bin"]
    nhd = nhead * D

    def _heads(start, width):
        w3 = win[:, start:start + nhead * width]
        w3 = w3.reshape(D, nhead, width).transpose(1, 0, 2)          # (H, D, width)
        b3 = bin_[:, start:start + nhead * width]
        b3 = b3.reshape(1, nhead, width).transpose(1, 0, 2)          # (H, 1, width)
        return w3, b3

    scale = 1.0 / math.sqrt(D)
    wq3, bq3 = _heads(0, D)
    wq3, bq3 = wq3 * scale, bq3 * scale
    wk3, bk3 = _heads(nhd, D)
    wv3, bv3 = _heads(2 * nhd, dv)
    wout3 = params["wout"].reshape(nhead, dv, D)
    bout = params["bout"].reshape(1, D)

    bf16 = lambda a: a.astype(jnp.bfloat16)
    weight_args = [
        bf16(wq3), bq3, bf16(wk3), bk3, bf16(wv3), bv3,
        bf16(wout3), bout,
        params["g1"], params["be1"],
        bf16(params["w1"]), params["bb1"], bf16(params["w2"]), params["bb2"],
        params["g2"], params["be2"],
    ]

    kernel = functools.partial(_attnhp_kernel, nhead=nhead, use_ff=use_ff,
                               eps=eps, tq=tq)

    in_specs = [
        pl.BlockSpec((1, L, D), lambda b, qt: (b, 0, 0)),            # full seq (resident)
        pl.BlockSpec((1, 1, L), lambda b, qt: (b, 0, 0)),            # padding bias
        pl.BlockSpec((tq, L), lambda b, qt: (qt, 0)),                # attn-mask bias
        pl.BlockSpec((1, tq, 1), lambda b, qt: (b, qt, 0)),          # row-valid flag
    ] + [_const_spec(a) for a in weight_args]

    return pl.pallas_call(
        kernel,
        out_shape=jax.ShapeDtypeStruct((B, L, D), jnp.float32),
        grid_spec=pltpu.PrefetchScalarGridSpec(
            num_scalar_prefetch=0,
            grid=(B, n_qt),
            in_specs=in_specs,
            out_specs=pl.BlockSpec((1, tq, D), lambda b, qt: (b, qt, 0)),
            scratch_shapes=[
                pltpu.VMEM((nhead, L, D), jnp.bfloat16),             # cached K
                pltpu.VMEM((nhead, L, dv), jnp.bfloat16),            # cached V
            ]),
        compiler_params=pltpu.CompilerParams(
            dimension_semantics=("parallel", "arbitrary"),
            vmem_limit_bytes=64 * 1024 * 1024),
    )(src, pad_bias, am_bias, row_valid, *weight_args)


# ---------------------------------------------------------------------------
# Pure-JAX reference (mirrors the PyTorch forward, true f32) for validation.
# ---------------------------------------------------------------------------
def _layer_norm(x, gamma, beta, eps=1e-5):
    mu = jnp.mean(x, axis=-1, keepdims=True)
    var = jnp.mean((x - mu) ** 2, axis=-1, keepdims=True)
    return (x - mu) / jnp.sqrt(var + eps) * gamma + beta


def reference_forward(src, mask, attn_mask, p, *, nhead, dim_value, ninf=-1e6):
    B, L, D = src.shape
    proj = jnp.einsum("bld,do->blo", src, p["win"], precision=HIGHEST) + p["bin"]
    nhd = nhead * D
    q = proj[..., :nhd].reshape(B, L, nhead, D)
    k = proj[..., nhd:2 * nhd].reshape(B, L, nhead, D)
    v = proj[..., 2 * nhd:].reshape(B, L, nhead, dim_value)
    outs = []
    for i in range(nhead):
        w = jnp.einsum("bld,bmd->blm", q[:, :, i], k[:, :, i],
                       precision=HIGHEST) / math.sqrt(D)
        w = jnp.where(mask[:, None, :], ninf, w)
        w = jnp.where(attn_mask[None], ninf, w)
        w = jax.nn.softmax(w, axis=-1)
        outs.append(jnp.einsum("blm,bmv->blv", w, v[:, :, i], precision=HIGHEST))
    res = jnp.einsum("blv,vd->bld", jnp.concatenate(outs, -1), p["wout"],
                     precision=HIGHEST) + p["bout"]
    invalid = jnp.logical_or(mask[:, None, :], attn_mask[None])
    res = jnp.where(jnp.all(invalid, axis=2, keepdims=True), 0.0, res)
    x = _layer_norm(src + res, p["g1"], p["be1"])
    f = jnp.maximum(jnp.einsum("bld,df->blf", x, p["w1"], precision=HIGHEST)
                    + p["bb1"], 0.0)
    f = jnp.einsum("blf,fd->bld", f, p["w2"], precision=HIGHEST) + p["bb2"]
    return _layer_norm(x + f, p["g2"], p["be2"])


def init_params(key, d_model, nhead, dim_value, dim_ff):
    out_in = 2 * nhead * d_model + nhead * dim_value
    ks = jax.random.split(key, 12)
    n = lambda k, s, sc: jax.random.normal(k, s, jnp.float32) * sc
    if nhead * dim_value != d_model:
        wout = n(ks[2], (nhead * dim_value, d_model), 0.1)
        bout = n(ks[3], (1, d_model), 0.01)
    else:
        wout = jnp.eye(d_model, dtype=jnp.float32)      # Identity out_proj case
        bout = jnp.zeros((1, d_model), jnp.float32)
    return dict(
        win=n(ks[0], (d_model, out_in), 0.1),
        bin=n(ks[1], (1, out_in), 0.01),
        wout=wout,
        bout=bout,
        g1=1.0 + n(ks[4], (1, d_model), 0.05),
        be1=n(ks[5], (1, d_model), 0.01),
        w1=n(ks[6], (d_model, dim_ff), 0.1),
        bb1=n(ks[7], (1, dim_ff), 0.01),
        w2=n(ks[8], (dim_ff, d_model), 0.1),
        bb2=n(ks[9], (1, d_model), 0.01),
        g2=1.0 + n(ks[10], (1, d_model), 0.05),
        be2=n(ks[11], (1, d_model), 0.01),
    )


def _run_case(name, key, *, B, L, D, nhead, dv, dim_ff, lengths, disabled_row, q_tile):
    k_src, k_par = jax.random.split(key)
    src = jax.random.normal(k_src, (B, L, D), jnp.float32)
    mask = jnp.arange(L)[None, :] >= jnp.asarray(lengths)[:, None]   # (B, L) bool
    attn_mask = jnp.triu(jnp.ones((L, L), bool), k=1)
    attn_mask = attn_mask.at[disabled_row].set(True)                 # fully disabled row
    params = init_params(k_par, D, nhead, dv, dim_ff)

    out = attnhp_transformer_layer(src, mask, attn_mask, params,
                                   nhead=nhead, dim_value=dv, q_tile=q_tile)
    out = jax.block_until_ready(out)

    ref = reference_forward(src, mask, attn_mask, params, nhead=nhead, dim_value=dv)
    ref = jax.block_until_ready(ref)

    if not bool(jnp.allclose(out, ref, atol=5e-2, rtol=5e-2)):
        raise AssertionError(
            f"{name}: mismatch, max abs diff = {float(jnp.max(jnp.abs(out - ref)))}")


if __name__ == "__main__":
    root = jax.random.PRNGKey(0)
    k1, k2 = jax.random.split(root)
    # case 1: real out_proj (nhead*dim_value != d_model), single query tile.
    _run_case("case1", k1, B=2, L=8, D=32, nhead=2, dv=8, dim_ff=64,
              lengths=[8, 5], disabled_row=3, q_tile=128)
    # case 2: identity out_proj (nhead*dim_value == d_model), two query tiles
    #         (exercises cached-K/V reuse, the dynamic query-tile slice and
    #          batch transitions).
    _run_case("case2", k2, B=2, L=16, D=32, nhead=2, dv=16, dim_ff=64,
              lengths=[16, 11], disabled_row=5, q_tile=8)
    print("KERNEL_OK")
</pallas_src>

<mosaic_0001>
module attributes {stable_mosaic.version = 11 : i64} {
  func.func @_attnhp_kernel(%arg0: i32, %arg1: i32, %arg2: memref<1x8x32xf32, #tpu.memory_space<vmem>>, %arg3: memref<1x1x8xbf16, #tpu.memory_space<vmem>>, %arg4: memref<8x8xbf16, #tpu.memory_space<vmem>>, %arg5: memref<1x8x1xf32, #tpu.memory_space<vmem>>, %arg6: memref<2x32x32xbf16, #tpu.memory_space<vmem>>, %arg7: memref<2x1x32xf32, #tpu.memory_space<vmem>>, %arg8: memref<2x32x32xbf16, #tpu.memory_space<vmem>>, %arg9: memref<2x1x32xf32, #tpu.memory_space<vmem>>, %arg10: memref<2x32x8xbf16, #tpu.memory_space<vmem>>, %arg11: memref<2x1x8xf32, #tpu.memory_space<vmem>>, %arg12: memref<2x8x32xbf16, #tpu.memory_space<vmem>>, %arg13: memref<1x32xf32, #tpu.memory_space<vmem>>, %arg14: memref<1x32xf32, #tpu.memory_space<vmem>>, %arg15: memref<1x32xf32, #tpu.memory_space<vmem>>, %arg16: memref<32x64xbf16, #tpu.memory_space<vmem>>, %arg17: memref<1x64xf32, #tpu.memory_space<vmem>>, %arg18: memref<64x32xbf16, #tpu.memory_space<vmem>>, %arg19: memref<1x32xf32, #tpu.memory_space<vmem>>, %arg20: memref<1x32xf32, #tpu.memory_space<vmem>>, %arg21: memref<1x32xf32, #tpu.memory_space<vmem>>, %arg22: memref<1x8x32xf32, #tpu.memory_space<vmem>>, %arg23: memref<2x8x32xbf16, #tpu.memory_space<vmem>>, %arg24: memref<2x8x8xbf16, #tpu.memory_space<vmem>>) attributes {dimension_semantics = [#tpu.dimension_semantics<parallel>, #tpu.dimension_semantics<arbitrary>], iteration_bounds = array<i64: 2, 1>, scalar_prefetch = 0 : i64, scratch_operands = 2 : i64, tpu.core_type = #tpu.core_type<tc>, window_params = [{transform_indices = @transform_0, window_bounds = array<i64: 1, 8, 32>}, {transform_indices = @transform_1, window_bounds = array<i64: 1, 1, 8>}, {transform_indices = @transform_2, window_bounds = array<i64: 8, 8>}, {transform_indices = @transform_3, window_bounds = array<i64: 1, 8, 1>}, {pipeline_mode = #tpu.pipeline_mode<synchronous>, transform_indices = @transform_4, window_bounds = array<i64: 2, 32, 32>}, {pipeline_mode = #tpu.pipeline_mode<synchronous>, transform_indices = @transform_5, window_bounds = array<i64: 2, 1, 32>}, {pipeline_mode = #tpu.pipeline_mode<synchronous>, transform_indices = @transform_6, window_bounds = array<i64: 2, 32, 32>}, {pipeline_mode = #tpu.pipeline_mode<synchronous>, transform_indices = @transform_7, window_bounds = array<i64: 2, 1, 32>}, {pipeline_mode = #tpu.pipeline_mode<synchronous>, transform_indices = @transform_8, window_bounds = array<i64: 2, 32, 8>}, {pipeline_mode = #tpu.pipeline_mode<synchronous>, transform_indices = @transform_9, window_bounds = array<i64: 2, 1, 8>}, {pipeline_mode = #tpu.pipeline_mode<synchronous>, transform_indices = @transform_10, window_bounds = array<i64: 2, 8, 32>}, {pipeline_mode = #tpu.pipeline_mode<synchronous>, transform_indices = @transform_11, window_bounds = array<i64: 1, 32>}, {pipeline_mode = #tpu.pipeline_mode<synchronous>, transform_indices = @transform_12, window_bounds = array<i64: 1, 32>}, {pipeline_mode = #tpu.pipeline_mode<synchronous>, transform_indices = @transform_13, window_bounds = array<i64: 1, 32>}, {pipeline_mode = #tpu.pipeline_mode<synchronous>, transform_indices = @transform_14, window_bounds = array<i64: 32, 64>}, {pipeline_mode = #tpu.pipeline_mode<synchronous>, transform_indices = @transform_15, window_bounds = array<i64: 1, 64>}, {pipeline_mode = #tpu.pipeline_mode<synchronous>, transform_indices = @transform_16, window_bounds = array<i64: 64, 32>}, {pipeline_mode = #tpu.pipeline_mode<synchronous>, transform_indices = @transform_17, window_bounds = array<i64: 1, 32>}, {pipeline_mode = #tpu.pipeline_mode<synchronous>, transform_indices = @transform_18, window_bounds = array<i64: 1, 32>}, {pipeline_mode = #tpu.pipeline_mode<synchronous>, transform_indices = @transform_19, window_bounds = array<i64: 1, 32>}, {transform_indices = @transform_20, window_bounds = array<i64: 1, 8, 32>}]} {
    %c0_i32 = arith.constant 0 : i32
    %0 = arith.cmpi eq, %arg1, %c0_i32 : i32
    %1 = arith.extui %0 : i1 to i32
    %c0_i32_0 = arith.constant 0 : i32
    %2 = arith.cmpi ne, %1, %c0_i32_0 : i32
    scf.if %2 {
      %c0_71 = arith.constant 0 : index
      %c0_72 = arith.constant 0 : index
      %c0_73 = arith.constant 0 : index
      %129 = vector.load %arg2[%c0_71, %c0_72, %c0_73] : memref<1x8x32xf32, #tpu.memory_space<vmem>>, vector<1x8x32xf32>
      %130 = vector.shape_cast %129 : vector<1x8x32xf32> to vector<8x32xf32>
      %131 = arith.truncf %130 : vector<8x32xf32> to vector<8x32xbf16>
      %c0_74 = arith.constant 0 : index
      %c0_75 = arith.constant 0 : index
      %c0_76 = arith.constant 0 : index
      %132 = vector.load %arg8[%c0_74, %c0_75, %c0_76] : memref<2x32x32xbf16, #tpu.memory_space<vmem>>, vector<1x32x32xbf16>
      %133 = vector.shape_cast %132 : vector<1x32x32xbf16> to vector<32x32xbf16>
      %cst_77 = arith.constant dense<0.000000e+00> : vector<8x32xf32>
      %134 = tpu.matmul %131, %133, %cst_77 {dimension_numbers = #tpu.dot_dimension_numbers<[1], [0], [0], [1], [0, 0, 1, 1], [], []>} : vector<8x32xbf16>, vector<32x32xbf16>, vector<8x32xf32> -> vector<8x32xf32>
      %c0_78 = arith.constant 0 : index
      %c0_79 = arith.constant 0 : index
      %c0_80 = arith.constant 0 : index
      %135 = vector.load %arg9[%c0_78, %c0_79, %c0_80] : memref<2x1x32xf32, #tpu.memory_space<vmem>>, vector<1x1x32xf32>
      %136 = vector.shape_cast %135 : vector<1x1x32xf32> to vector<1x32xf32>
      %137 = vector.broadcast %136 : vector<1x32xf32> to vector<8x32xf32>
      %138 = arith.addf %134, %137 : vector<8x32xf32>
      %c0_81 = arith.constant 0 : index
      %c0_82 = arith.constant 0 : index
      %c0_83 = arith.constant 0 : index
      %139 = vector.load %arg10[%c0_81, %c0_82, %c0_83] : memref<2x32x8xbf16, #tpu.memory_space<vmem>>, vector<1x32x8xbf16>
      %140 = vector.shape_cast %139 : vector<1x32x8xbf16> to vector<32x8xbf16>
      %cst_84 = arith.constant dense<0.000000e+00> : vector<8x8xf32>
      %141 = tpu.matmul %131, %140, %cst_84 {dimension_numbers = #tpu.dot_dimension_numbers<[1], [0], [0], [1], [0, 0, 1, 1], [], []>} : vector<8x32xbf16>, vector<32x8xbf16>, vector<8x8xf32> -> vector<8x8xf32>
      %c0_85 = arith.constant 0 : index
      %c0_86 = arith.constant 0 : index
      %c0_87 = arith.constant 0 : index
      %142 = vector.load %arg11[%c0_85, %c0_86, %c0_87] : memref<2x1x8xf32, #tpu.memory_space<vmem>>, vector<1x1x8xf32>
      %143 = vector.shape_cast %142 : vector<1x1x8xf32> to vector<1x8xf32>
      %144 = vector.broadcast %143 : vector<1x8xf32> to vector<8x8xf32>
      %145 = arith.addf %141, %144 : vector<8x8xf32>
      %146 = arith.truncf %138 : vector<8x32xf32> to vector<8x32xbf16>
      %c0_88 = arith.constant 0 : index
      %c0_89 = arith.constant 0 : index
      %c0_90 = arith.constant 0 : index
      %147 = vector.load %arg23[%c0_88, %c0_89, %c0_90] : memref<2x8x32xbf16, #tpu.memory_space<vmem>>, vector<1x8x32xbf16>
      %148 = vector.shape_cast %147 : vector<1x8x32xbf16> to vector<8x32xbf16>
      %149 = vector.shape_cast %146 : vector<8x32xbf16> to vector<1x8x32xbf16>
      tpu.vector_store %arg23[%c0_88, %c0_89, %c0_90], %149 {strides = array<i32>} : memref<2x8x32xbf16, #tpu.memory_space<vmem>>, vector<1x8x32xbf16>,
      %150 = arith.truncf %145 : vector<8x8xf32> to vector<8x8xbf16>
      %c0_91 = arith.constant 0 : index
      %c0_92 = arith.constant 0 : index
      %c0_93 = arith.constant 0 : index
      %151 = vector.load %arg24[%c0_91, %c0_92, %c0_93] : memref<2x8x8xbf16, #tpu.memory_space<vmem>>, vector<1x8x8xbf16>
      %152 = vector.shape_cast %151 : vector<1x8x8xbf16> to vector<8x8xbf16>
      %153 = vector.shape_cast %150 : vector<8x8xbf16> to vector<1x8x8xbf16>
      tpu.vector_store %arg24[%c0_91, %c0_92, %c0_93], %153 {strides = array<i32>} : memref<2x8x8xbf16, #tpu.memory_space<vmem>>, vector<1x8x8xbf16>,
      %c1_94 = arith.constant 1 : index
      %c0_95 = arith.constant 0 : index
      %c0_96 = arith.constant 0 : index
      %154 = vector.load %arg8[%c1_94, %c0_95, %c0_96] : memref<2x32x32xbf16, #tpu.memory_space<vmem>>, vector<1x32x32xbf16>
      %155 = vector.shape_cast %154 : vector<1x32x32xbf16> to vector<32x32xbf16>
      %cst_97 = arith.constant dense<0.000000e+00> : vector<8x32xf32>
      %156 = tpu.matmul %131, %155, %cst_97 {dimension_numbers = #tpu.dot_dimension_numbers<[1], [0], [0], [1], [0, 0, 1, 1], [], []>} : vector<8x32xbf16>, vector<32x32xbf16>, vector<8x32xf32> -> vector<8x32xf32>
      %c1_98 = arith.constant 1 : index
      %c0_99 = arith.constant 0 : index
      %c0_100 = arith.constant 0 : index
      %157 = vector.load %arg9[%c1_98, %c0_99, %c0_100] : memref<2x1x32xf32, #tpu.memory_space<vmem>>, vector<1x1x32xf32>
      %158 = vector.shape_cast %157 : vector<1x1x32xf32> to vector<1x32xf32>
      %159 = vector.broadcast %158 : vector<1x32xf32> to vector<8x32xf32>
      %160 = arith.addf %156, %159 : vector<8x32xf32>
      %c1_101 = arith.constant 1 : index
      %c0_102 = arith.constant 0 : index
      %c0_103 = arith.constant 0 : index
      %161 = vector.load %arg10[%c1_101, %c0_102, %c0_103] : memref<2x32x8xbf16, #tpu.memory_space<vmem>>, vector<1x32x8xbf16>
      %162 = vector.shape_cast %161 : vector<1x32x8xbf16> to vector<32x8xbf16>
      %cst_104 = arith.constant dense<0.000000e+00> : vector<8x8xf32>
      %163 = tpu.matmul %131, %162, %cst_104 {dimension_numbers = #tpu.dot_dimension_numbers<[1], [0], [0], [1], [0, 0, 1, 1], [], []>} : vector<8x32xbf16>, vector<32x8xbf16>, vector<8x8xf32> -> vector<8x8xf32>
      %c1_105 = arith.constant 1 : index
      %c0_106 = arith.constant 0 : index
      %c0_107 = arith.constant 0 : index
      %164 = vector.load %arg11[%c1_105, %c0_106, %c0_107] : memref<2x1x8xf32, #tpu.memory_space<vmem>>, vector<1x1x8xf32>
      %165 = vector.shape_cast %164 : vector<1x1x8xf32> to vector<1x8xf32>
      %166 = vector.broadcast %165 : vector<1x8xf32> to vector<8x8xf32>
      %167 = arith.addf %163, %166 : vector<8x8xf32>
      %168 = arith.truncf %160 : vector<8x32xf32> to vector<8x32xbf16>
      %c1_108 = arith.constant 1 : index
      %c0_109 = arith.constant 0 : index
      %c0_110 = arith.constant 0 : index
      %169 = vector.load %arg23[%c1_108, %c0_109, %c0_110] : memref<2x8x32xbf16, #tpu.memory_space<vmem>>, vector<1x8x32xbf16>
      %170 = vector.shape_cast %169 : vector<1x8x32xbf16> to vector<8x32xbf16>
      %171 = vector.shape_cast %168 : vector<8x32xbf16> to vector<1x8x32xbf16>
      tpu.vector_store %arg23[%c1_108, %c0_109, %c0_110], %171 {strides = array<i32>} : memref<2x8x32xbf16, #tpu.memory_space<vmem>>, vector<1x8x32xbf16>,
      %172 = arith.truncf %167 : vector<8x8xf32> to vector<8x8xbf16>
      %c1_111 = arith.constant 1 : index
      %c0_112 = arith.constant 0 : index
      %c0_113 = arith.constant 0 : index
      %173 = vector.load %arg24[%c1_111, %c0_112, %c0_113] : memref<2x8x8xbf16, #tpu.memory_space<vmem>>, vector<1x8x8xbf16>
      %174 = vector.shape_cast %173 : vector<1x8x8xbf16> to vector<8x8xbf16>
      %175 = vector.shape_cast %172 : vector<8x8xbf16> to vector<1x8x8xbf16>
      tpu.vector_store %arg24[%c1_111, %c0_112, %c0_113], %175 {strides = array<i32>} : memref<2x8x8xbf16, #tpu.memory_space<vmem>>, vector<1x8x8xbf16>,
    } else {
    }
    %c8_i32 = arith.constant 8 : i32
    %3 = arith.muli %arg1, %c8_i32 : i32
    %4 = tpu.assume_multiple %3, 8 : i32
    %c0 = arith.constant 0 : index
    %5 = arith.index_cast %4 : i32 to index
    %c0_1 = arith.constant 0 : index
    %6 = vector.load %arg2[%c0, %5, %c0_1] : memref<1x8x32xf32, #tpu.memory_space<vmem>>, vector<1x8x32xf32>
    %7 = vector.shape_cast %6 : vector<1x8x32xf32> to vector<8x32xf32>
    %8 = arith.truncf %7 : vector<8x32xf32> to vector<8x32xbf16>
    %c0_2 = arith.constant 0 : index
    %c0_3 = arith.constant 0 : index
    %c0_4 = arith.constant 0 : index
    %9 = vector.load %arg6[%c0_2, %c0_3, %c0_4] : memref<2x32x32xbf16, #tpu.memory_space<vmem>>, vector<1x32x32xbf16>
    %10 = vector.shape_cast %9 : vector<1x32x32xbf16> to vector<32x32xbf16>
    %cst = arith.constant dense<0.000000e+00> : vector<8x32xf32>
    %11 = tpu.matmul %8, %10, %cst {dimension_numbers = #tpu.dot_dimension_numbers<[1], [0], [0], [1], [0, 0, 1, 1], [], []>} : vector<8x32xbf16>, vector<32x32xbf16>, vector<8x32xf32> -> vector<8x32xf32>
    %c0_5 = arith.constant 0 : index
    %c0_6 = arith.constant 0 : index
    %c0_7 = arith.constant 0 : index
    %12 = vector.load %arg7[%c0_5, %c0_6, %c0_7] : memref<2x1x32xf32, #tpu.memory_space<vmem>>, vector<1x1x32xf32>
    %13 = vector.shape_cast %12 : vector<1x1x32xf32> to vector<1x32xf32>
    %14 = vector.broadcast %13 : vector<1x32xf32> to vector<8x32xf32>
    %15 = arith.addf %11, %14 : vector<8x32xf32>
    %c1 = arith.constant 1 : index
    %c0_8 = arith.constant 0 : index
    %c0_9 = arith.constant 0 : index
    %16 = vector.load %arg6[%c1, %c0_8, %c0_9] : memref<2x32x32xbf16, #tpu.memory_space<vmem>>, vector<1x32x32xbf16>
    %17 = vector.shape_cast %16 : vector<1x32x32xbf16> to vector<32x32xbf16>
    %cst_10 = arith.constant dense<0.000000e+00> : vector<8x32xf32>
    %18 = tpu.matmul %8, %17, %cst_10 {dimension_numbers = #tpu.dot_dimension_numbers<[1], [0], [0], [1], [0, 0, 1, 1], [], []>} : vector<8x32xbf16>, vector<32x32xbf16>, vector<8x32xf32> -> vector<8x32xf32>
    %c1_11 = arith.constant 1 : index
    %c0_12 = arith.constant 0 : index
    %c0_13 = arith.constant 0 : index
    %19 = vector.load %arg7[%c1_11, %c0_12, %c0_13] : memref<2x1x32xf32, #tpu.memory_space<vmem>>, vector<1x1x32xf32>
    %20 = vector.shape_cast %19 : vector<1x1x32xf32> to vector<1x32xf32>
    %21 = vector.broadcast %20 : vector<1x32xf32> to vector<8x32xf32>
    %22 = arith.addf %18, %21 : vector<8x32xf32>
    %23 = vector.shape_cast %15 : vector<8x32xf32> to vector<1x8x32xf32>
    %24 = vector.shape_cast %22 : vector<8x32xf32> to vector<1x8x32xf32>
    %25 = tpu.concatenate %23, %24 in 0 : vector<1x8x32xf32>, vector<1x8x32xf32> -> vector<2x8x32xf32>
    %26 = arith.truncf %25 : vector<2x8x32xf32> to vector<2x8x32xbf16>
    %c0_14 = arith.constant 0 : index
    %c0_15 = arith.constant 0 : index
    %c0_16 = arith.constant 0 : index
    %27 = vector.load %arg23[%c0_14, %c0_15, %c0_16] : memref<2x8x32xbf16, #tpu.memory_space<vmem>>, vector<2x8x32xbf16>
    %c0_17 = arith.constant 0 : index
    %c0_18 = arith.constant 0 : index
    %c0_19 = arith.constant 0 : index
    %28 = vector.load %arg24[%c0_17, %c0_18, %c0_19] : memref<2x8x8xbf16, #tpu.memory_space<vmem>>, vector<2x8x8xbf16>
    "tpu.trace_start"() <{level = 10 : i32, message = "hqd,hkd->hqk"}> : () -> ()
    %cst_20 = arith.constant dense<0.000000e+00> : vector<2x8x8xf32>
    %29 = tpu.matmul %26, %27, %cst_20 {dimension_numbers = #tpu.dot_dimension_numbers<[2], [2], [1], [1], [0, 0, 0, 1, 1, 1], [0], [0]>} : vector<2x8x32xbf16>, vector<2x8x32xbf16>, vector<2x8x8xf32> -> vector<2x8x8xf32>
    "tpu.trace_stop"() : () -> ()
    %c0_21 = arith.constant 0 : index
    %c0_22 = arith.constant 0 : index
    %30 = vector.load %arg4[%c0_21, %c0_22] : memref<8x8xbf16, #tpu.memory_space<vmem>>, vector<8x8xbf16>
    %31 = arith.extf %30 : vector<8x8xbf16> to vector<8x8xf32>
    %32 = vector.shape_cast %31 : vector<8x8xf32> to vector<1x8x8xf32>
    %33 = vector.broadcast %32 : vector<1x8x8xf32> to vector<2x8x8xf32>
    %34 = arith.addf %29, %33 : vector<2x8x8xf32>
    %c0_23 = arith.constant 0 : index
    %c0_24 = arith.constant 0 : index
    %c0_25 = arith.constant 0 : index
    %35 = vector.load %arg3[%c0_23, %c0_24, %c0_25] : memref<1x1x8xbf16, #tpu.memory_space<vmem>>, vector<1x1x8xbf16>
    %36 = arith.extf %35 : vector<1x1x8xbf16> to vector<1x1x8xf32>
    %37 = vector.broadcast %36 : vector<1x1x8xf32> to vector<2x8x8xf32>
    %38 = arith.addf %34, %37 : vector<2x8x8xf32>
    %cst_26 = arith.constant dense<0xFF800000> : vector<2x8xf32>
    %39 = vector.multi_reduction <maximumf>, %38, %cst_26 [2] : vector<2x8x8xf32> to vector<2x8xf32>
    %40 = vector.shape_cast %39 : vector<2x8xf32> to vector<2x8x1xf32>
    %41 = vector.broadcast %40 : vector<2x8x1xf32> to vector<2x8x8xf32>
    %42 = arith.subf %38, %41 : vector<2x8x8xf32>
    %43 = math.exp %42 : vector<2x8x8xf32>
    %cst_27 = arith.constant dense<0.000000e+00> : vector<2x8xf32>
    %44 = vector.multi_reduction <add>, %43, %cst_27 [2] : vector<2x8x8xf32> to vector<2x8xf32>
    %45 = vector.shape_cast %44 : vector<2x8xf32> to vector<2x8x1xf32>
    %46 = tpu.reciprocal %45 {approx = true} : vector<2x8x1xf32> -> vector<2x8x1xf32>
    %47 = vector.broadcast %46 : vector<2x8x1xf32> to vector<2x8x8xf32>
    %48 = arith.mulf %43, %47 : vector<2x8x8xf32>
    %49 = arith.truncf %48 : vector<2x8x8xf32> to vector<2x8x8xbf16>
    "tpu.trace_start"() <{level = 10 : i32, message = "hqk,hkv->hqv"}> : () -> ()
    %cst_28 = arith.constant dense<0.000000e+00> : vector<2x8x8xf32>
    %50 = tpu.matmul %49, %28, %cst_28 {dimension_numbers = #tpu.dot_dimension_numbers<[2], [1], [1], [2], [0, 0, 0, 1, 1, 2], [0], [0]>} : vector<2x8x8xbf16>, vector<2x8x8xbf16>, vector<2x8x8xf32> -> vector<2x8x8xf32>
    "tpu.trace_stop"() : () -> ()
    %51 = arith.truncf %50 : vector<2x8x8xf32> to vector<2x8x8xbf16>
    %c0_29 = arith.constant 0 : index
    %c0_30 = arith.constant 0 : index
    %c0_31 = arith.constant 0 : index
    %52 = vector.load %arg12[%c0_29, %c0_30, %c0_31] : memref<2x8x32xbf16, #tpu.memory_space<vmem>>, vector<2x8x32xbf16>
    "tpu.trace_start"() <{level = 10 : i32, message = "hqv,hvd->hqd"}> : () -> ()
    %cst_32 = arith.constant dense<0.000000e+00> : vector<2x8x32xf32>
    %53 = tpu.matmul %51, %52, %cst_32 {dimension_numbers = #tpu.dot_dimension_numbers<[2], [1], [1], [2], [0, 0, 0, 1, 1, 2], [0], [0]>} : vector<2x8x8xbf16>, vector<2x8x32xbf16>, vector<2x8x32xf32> -> vector<2x8x32xf32>
    "tpu.trace_stop"() : () -> ()
    %cst_33 = arith.constant dense<0.000000e+00> : vector<8x32xf32>
    %54 = vector.multi_reduction <add>, %53, %cst_33 [0] : vector<2x8x32xf32> to vector<8x32xf32>
    %c0_34 = arith.constant 0 : index
    %c0_35 = arith.constant 0 : index
    %55 = vector.load %arg13[%c0_34, %c0_35] : memref<1x32xf32, #tpu.memory_space<vmem>>, vector<1x32xf32>
    %56 = vector.broadcast %55 : vector<1x32xf32> to vector<8x32xf32>
    %57 = arith.addf %54, %56 : vector<8x32xf32>
    %c0_36 = arith.constant 0 : index
    %c0_37 = arith.constant 0 : index
    %c0_38 = arith.constant 0 : index
    %58 = vector.load %arg5[%c0_36, %c0_37, %c0_38] : memref<1x8x1xf32, #tpu.memory_space<vmem>>, vector<1x8x1xf32>
    %59 = vector.shape_cast %58 : vector<1x8x1xf32> to vector<8x1xf32>
    %60 = vector.broadcast %59 : vector<8x1xf32> to vector<8x32xf32>
    %61 = arith.mulf %57, %60 : vector<8x32xf32>
    %62 = arith.addf %7, %61 : vector<8x32xf32>
    %cst_39 = arith.constant dense<0.000000e+00> : vector<8xf32>
    %63 = vector.multi_reduction <add>, %62, %cst_39 [1] : vector<8x32xf32> to vector<8xf32>
    %64 = vector.shape_cast %63 : vector<8xf32> to vector<8x1xf32>
    %cst_40 = arith.constant 3.200000e+01 : f32
    %65 = vector.broadcast %cst_40 : f32 to vector<8x1xf32>
    %66 = arith.divf %64, %65 : vector<8x1xf32>
    %67 = vector.broadcast %66 : vector<8x1xf32> to vector<8x32xf32>
    %68 = arith.subf %62, %67 : vector<8x32xf32>
    %69 = arith.mulf %68, %68 : vector<8x32xf32>
    %cst_41 = arith.constant dense<0.000000e+00> : vector<8xf32>
    %70 = vector.multi_reduction <add>, %69, %cst_41 [1] : vector<8x32xf32> to vector<8xf32>
    %71 = vector.shape_cast %70 : vector<8xf32> to vector<8x1xf32>
    %cst_42 = arith.constant 3.200000e+01 : f32
    %72 = vector.broadcast %cst_42 : f32 to vector<8x1xf32>
    %73 = arith.divf %71, %72 : vector<8x1xf32>
    %74 = vector.broadcast %66 : vector<8x1xf32> to vector<8x32xf32>
    %75 = arith.subf %62, %74 : vector<8x32xf32>
    %cst_43 = arith.constant 9.99999974E-6 : f32
    %76 = vector.broadcast %cst_43 : f32 to vector<8x1xf32>
    %77 = arith.addf %73, %76 : vector<8x1xf32>
    %78 = math.rsqrt %77 : vector<8x1xf32>
    %79 = vector.broadcast %78 : vector<8x1xf32> to vector<8x32xf32>
    %80 = arith.mulf %75, %79 : vector<8x32xf32>
    %c0_44 = arith.constant 0 : index
    %c0_45 = arith.constant 0 : index
    %81 = vector.load %arg14[%c0_44, %c0_45] : memref<1x32xf32, #tpu.memory_space<vmem>>, vector<1x32xf32>
    %82 = vector.broadcast %81 : vector<1x32xf32> to vector<8x32xf32>
    %83 = arith.mulf %80, %82 : vector<8x32xf32>
    %c0_46 = arith.constant 0 : index
    %c0_47 = arith.constant 0 : index
    %84 = vector.load %arg15[%c0_46, %c0_47] : memref<1x32xf32, #tpu.memory_space<vmem>>, vector<1x32xf32>
    %85 = vector.broadcast %84 : vector<1x32xf32> to vector<8x32xf32>
    %86 = arith.addf %83, %85 : vector<8x32xf32>
    %87 = arith.truncf %86 : vector<8x32xf32> to vector<8x32xbf16>
    %c0_48 = arith.constant 0 : index
    %c0_49 = arith.constant 0 : index
    %88 = vector.load %arg16[%c0_48, %c0_49] : memref<32x64xbf16, #tpu.memory_space<vmem>>, vector<32x64xbf16>
    %cst_50 = arith.constant dense<0.000000e+00> : vector<8x64xf32>
    %89 = tpu.matmul %87, %88, %cst_50 {dimension_numbers = #tpu.dot_dimension_numbers<[1], [0], [0], [1], [0, 0, 1, 1], [], []>} : vector<8x32xbf16>, vector<32x64xbf16>, vector<8x64xf32> -> vector<8x64xf32>
    %c0_51 = arith.constant 0 : index
    %c0_52 = arith.constant 0 : index
    %90 = vector.load %arg17[%c0_51, %c0_52] : memref<1x64xf32, #tpu.memory_space<vmem>>, vector<1x64xf32>
    %91 = vector.broadcast %90 : vector<1x64xf32> to vector<8x64xf32>
    %92 = arith.addf %89, %91 : vector<8x64xf32>
    %cst_53 = arith.constant 0.000000e+00 : f32
    %93 = vector.broadcast %cst_53 : f32 to vector<8x64xf32>
    %94 = arith.maximumf %92, %93 : vector<8x64xf32>
    %95 = arith.truncf %94 : vector<8x64xf32> to vector<8x64xbf16>
    %c0_54 = arith.constant 0 : index
    %c0_55 = arith.constant 0 : index
    %96 = vector.load %arg18[%c0_54, %c0_55] : memref<64x32xbf16, #tpu.memory_space<vmem>>, vector<64x32xbf16>
    %cst_56 = arith.constant dense<0.000000e+00> : vector<8x32xf32>
    %97 = tpu.matmul %95, %96, %cst_56 {dimension_numbers = #tpu.dot_dimension_numbers<[1], [0], [0], [1], [0, 0, 1, 1], [], []>} : vector<8x64xbf16>, vector<64x32xbf16>, vector<8x32xf32> -> vector<8x32xf32>
    %c0_57 = arith.constant 0 : index
    %c0_58 = arith.constant 0 : index
    %98 = vector.load %arg19[%c0_57, %c0_58] : memref<1x32xf32, #tpu.memory_space<vmem>>, vector<1x32xf32>
    %99 = vector.broadcast %98 : vector<1x32xf32> to vector<8x32xf32>
    %100 = arith.addf %97, %99 : vector<8x32xf32>
    %101 = arith.addf %86, %100 : vector<8x32xf32>
    %cst_59 = arith.constant dense<0.000000e+00> : vector<8xf32>
    %102 = vector.multi_reduction <add>, %101, %cst_59 [1] : vector<8x32xf32> to vector<8xf32>
    %103 = vector.shape_cast %102 : vector<8xf32> to vector<8x1xf32>
    %cst_60 = arith.constant 3.200000e+01 : f32
    %104 = vector.broadcast %cst_60 : f32 to vector<8x1xf32>
    %105 = arith.divf %103, %104 : vector<8x1xf32>
    %106 = vector.broadcast %105 : vector<8x1xf32> to vector<8x32xf32>
    %107 = arith.subf %101, %106 : vector<8x32xf32>
    %108 = arith.mulf %107, %107 : vector<8x32xf32>
    %cst_61 = arith.constant dense<0.000000e+00> : vector<8xf32>
    %109 = vector.multi_reduction <add>, %108, %cst_61 [1] : vector<8x32xf32> to vector<8xf32>
    %110 = vector.shape_cast %109 : vector<8xf32> to vector<8x1xf32>
    %cst_62 = arith.constant 3.200000e+01 : f32
    %111 = vector.broadcast %cst_62 : f32 to vector<8x1xf32>
    %112 = arith.divf %110, %111 : vector<8x1xf32>
    %113 = vector.broadcast %105 : vector<8x1xf32> to vector<8x32xf32>
    %114 = arith.subf %101, %113 : vector<8x32xf32>
    %cst_63 = arith.constant 9.99999974E-6 : f32
    %115 = vector.broadcast %cst_63 : f32 to vector<8x1xf32>
    %116 = arith.addf %112, %115 : vector<8x1xf32>
    %117 = math.rsqrt %116 : vector<8x1xf32>
    %118 = vector.broadcast %117 : vector<8x1xf32> to vector<8x32xf32>
    %119 = arith.mulf %114, %118 : vector<8x32xf32>
    %c0_64 = arith.constant 0 : index
    %c0_65 = arith.constant 0 : index
    %120 = vector.load %arg20[%c0_64, %c0_65] : memref<1x32xf32, #tpu.memory_space<vmem>>, vector<1x32xf32>
    %121 = vector.broadcast %120 : vector<1x32xf32> to vector<8x32xf32>
    %122 = arith.mulf %119, %121 : vector<8x32xf32>
    %c0_66 = arith.constant 0 : index
    %c0_67 = arith.constant 0 : index
    %123 = vector.load %arg21[%c0_66, %c0_67] : memref<1x32xf32, #tpu.memory_space<vmem>>, vector<1x32xf32>
    %124 = vector.broadcast %123 : vector<1x32xf32> to vector<8x32xf32>
    %125 = arith.addf %122, %124 : vector<8x32xf32>
    %c0_68 = arith.constant 0 : index
    %c0_69 = arith.constant 0 : index
    %c0_70 = arith.constant 0 : index
    %126 = vector.load %arg22[%c0_68, %c0_69, %c0_70] : memref<1x8x32xf32, #tpu.memory_space<vmem>>, vector<1x8x32xf32>
    %127 = vector.shape_cast %126 : vector<1x8x32xf32> to vector<8x32xf32>
    %128 = vector.shape_cast %125 : vector<8x32xf32> to vector<1x8x32xf32>
    tpu.vector_store %arg22[%c0_68, %c0_69, %c0_70], %128 {strides = array<i32>} : memref<1x8x32xf32, #tpu.memory_space<vmem>>, vector<1x8x32xf32>,
    return
  }
  func.func @transform_0(%arg0: i32, %arg1: i32) -> (i32, i32, i32) {
    %c0_i32 = arith.constant 0 : i32
    %c0_i32_0 = arith.constant 0 : i32
    %c0_i32_1 = arith.constant 0 : i32
    return %arg0, %c0_i32, %c0_i32_0 : i32, i32, i32
  }
  func.func @transform_1(%arg0: i32, %arg1: i32) -> (i32, i32, i32) {
    %c0_i32 = arith.constant 0 : i32
    %c0_i32_0 = arith.constant 0 : i32
    %c0_i32_1 = arith.constant 0 : i32
    return %arg0, %c0_i32, %c0_i32_0 : i32, i32, i32
  }
  func.func @transform_2(%arg0: i32, %arg1: i32) -> (i32, i32) {
    %c0_i32 = arith.constant 0 : i32
    %c0_i32_0 = arith.constant 0 : i32
    return %arg1, %c0_i32 : i32, i32
  }
  func.func @transform_3(%arg0: i32, %arg1: i32) -> (i32, i32, i32) {
    %c0_i32 = arith.constant 0 : i32
    %c0_i32_0 = arith.constant 0 : i32
    return %arg0, %arg1, %c0_i32 : i32, i32, i32
  }
  func.func @transform_4(%arg0: i32, %arg1: i32) -> (i32, i32, i32) {
    %c0_i32 = arith.constant 0 : i32
    %c0_i32_0 = arith.constant 0 : i32
    %c0_i32_1 = arith.constant 0 : i32
    %c0_i32_2 = arith.constant 0 : i32
    return %c0_i32, %c0_i32_0, %c0_i32_1 : i32, i32, i32
  }
  func.func @transform_5(%arg0: i32, %arg1: i32) -> (i32, i32, i32) {
    %c0_i32 = arith.constant 0 : i32
    %c0_i32_0 = arith.constant 0 : i32
    %c0_i32_1 = arith.constant 0 : i32
    %c0_i32_2 = arith.constant 0 : i32
    return %c0_i32, %c0_i32_0, %c0_i32_1 : i32, i32, i32
  }
  func.func @transform_6(%arg0: i32, %arg1: i32) -> (i32, i32, i32) {
    %c0_i32 = arith.constant 0 : i32
    %c0_i32_0 = arith.constant 0 : i32
    %c0_i32_1 = arith.constant 0 : i32
    %c0_i32_2 = arith.constant 0 : i32
    return %c0_i32, %c0_i32_0, %c0_i32_1 : i32, i32, i32
  }
  func.func @transform_7(%arg0: i32, %arg1: i32) -> (i32, i32, i32) {
    %c0_i32 = arith.constant 0 : i32
    %c0_i32_0 = arith.constant 0 : i32
    %c0_i32_1 = arith.constant 0 : i32
    %c0_i32_2 = arith.constant 0 : i32
    return %c0_i32, %c0_i32_0, %c0_i32_1 : i32, i32, i32
  }
  func.func @transform_8(%arg0: i32, %arg1: i32) -> (i32, i32, i32) {
    %c0_i32 = arith.constant 0 : i32
    %c0_i32_0 = arith.constant 0 : i32
    %c0_i32_1 = arith.constant 0 : i32
    %c0_i32_2 = arith.constant 0 : i32
    return %c0_i32, %c0_i32_0, %c0_i32_1 : i32, i32, i32
  }
  func.func @transform_9(%arg0: i32, %arg1: i32) -> (i32, i32, i32) {
    %c0_i32 = arith.constant 0 : i32
    %c0_i32_0 = arith.constant 0 : i32
    %c0_i32_1 = arith.constant 0 : i32
    %c0_i32_2 = arith.constant 0 : i32
    return %c0_i32, %c0_i32_0, %c0_i32_1 : i32, i32, i32
  }
  func.func @transform_10(%arg0: i32, %arg1: i32) -> (i32, i32, i32) {
    %c0_i32 = arith.constant 0 : i32
    %c0_i32_0 = arith.constant 0 : i32
    %c0_i32_1 = arith.constant 0 : i32
    %c0_i32_2 = arith.constant 0 : i32
    return %c0_i32, %c0_i32_0, %c0_i32_1 : i32, i32, i32
  }
  func.func @transform_11(%arg0: i32, %arg1: i32) -> (i32, i32) {
    %c0_i32 = arith.constant 0 : i32
    %c0_i32_0 = arith.constant 0 : i32
    %c0_i32_1 = arith.constant 0 : i32
    return %c0_i32, %c0_i32_0 : i32, i32
  }
  func.func @transform_12(%arg0: i32, %arg1: i32) -> (i32, i32) {
    %c0_i32 = arith.constant 0 : i32
    %c0_i32_0 = arith.constant 0 : i32
    %c0_i32_1 = arith.constant 0 : i32
    return %c0_i32, %c0_i32_0 : i32, i32
  }
  func.func @transform_13(%arg0: i32, %arg1: i32) -> (i32, i32) {
    %c0_i32 = arith.constant 0 : i32
    %c0_i32_0 = arith.constant 0 : i32
    %c0_i32_1 = arith.constant 0 : i32
    return %c0_i32, %c0_i32_0 : i32, i32
  }
  func.func @transform_14(%arg0: i32, %arg1: i32) -> (i32, i32) {
    %c0_i32 = arith.constant 0 : i32
    %c0_i32_0 = arith.constant 0 : i32
    %c0_i32_1 = arith.constant 0 : i32
    return %c0_i32, %c0_i32_0 : i32, i32
  }
  func.func @transform_15(%arg0: i32, %arg1: i32) -> (i32, i32) {
    %c0_i32 = arith.constant 0 : i32
    %c0_i32_0 = arith.constant 0 : i32
    %c0_i32_1 = arith.constant 0 : i32
    return %c0_i32, %c0_i32_0 : i32, i32
  }
  func.func @transform_16(%arg0: i32, %arg1: i32) -> (i32, i32) {
    %c0_i32 = arith.constant 0 : i32
    %c0_i32_0 = arith.constant 0 : i32
    %c0_i32_1 = arith.constant 0 : i32
    return %c0_i32, %c0_i32_0 : i32, i32
  }
  func.func @transform_17(%arg0: i32, %arg1: i32) -> (i32, i32) {
    %c0_i32 = arith.constant 0 : i32
    %c0_i32_0 = arith.constant 0 : i32
    %c0_i32_1 = arith.constant 0 : i32
    return %c0_i32, %c0_i32_0 : i32, i32
  }
  func.func @transform_18(%arg0: i32, %arg1: i32) -> (i32, i32) {
    %c0_i32 = arith.constant 0 : i32
    %c0_i32_0 = arith.constant 0 : i32
    %c0_i32_1 = arith.constant 0 : i32
    return %c0_i32, %c0_i32_0 : i32, i32
  }
  func.func @transform_19(%arg0: i32, %arg1: i32) -> (i32, i32) {
    %c0_i32 = arith.constant 0 : i32
    %c0_i32_0 = arith.constant 0 : i32
    %c0_i32_1 = arith.constant 0 : i32
    return %c0_i32, %c0_i32_0 : i32, i32
  }
  func.func @transform_20(%arg0: i32, %arg1: i32) -> (i32, i32, i32) {
    %c0_i32 = arith.constant 0 : i32
    %c0_i32_0 = arith.constant 0 : i32
    return %arg0, %arg1, %c0_i32 : i32, i32, i32
  }
}

</mosaic_0001>

<llo_original>
// kernel: tpu_custom_call.1
$region0: #{tpu_custom_call.1}
  #allocation0 [shape = 'u32[]', space=smem, size = 0x4, offset = 0x4, fixed_abs, tag = 'smem constant byte address 0x4 - core index']
  #allocation1 [shape = 'u32[144,128]{1,0:T(1,128)}', space=vmem, size = 0x12000, scoped, tag = 'internal scratch']
  #allocation2 [shape = 'bf16[2,8,32]{2,1,0:T(8,128)(2,1)}', space=vmem, size = 0x1000, scoped, tag = 'scratch operand']
  #allocation3 [shape = 'bf16[2,8,8]{2,1,0:T(8,128)(2,1)}', space=vmem, size = 0x1000, scoped, tag = 'scratch operand']
  %s0 = inlined_call_operand.hbm [shape: f32[2,8,32], index: 0, kind: input, shape index: {}]
  %s1 = inlined_call_operand.hbm [shape: bf16[2,1,8], index: 1, kind: input, shape index: {}]
  %s2 = inlined_call_operand.hbm [shape: bf16[8,8], index: 2, kind: input, shape index: {}]
  %s3 = inlined_call_operand.hbm [shape: f32[2,8,1], index: 3, kind: input, shape index: {}]
  %s4 = inlined_call_operand.hbm [shape: bf16[2,32,32], index: 4, kind: input, shape index: {}]
  %s5 = inlined_call_operand.hbm [shape: f32[2,1,32], index: 5, kind: input, shape index: {}]
  %s6 = inlined_call_operand.hbm [shape: bf16[2,32,32], index: 6, kind: input, shape index: {}]
  %s7 = inlined_call_operand.hbm [shape: f32[2,1,32], index: 7, kind: input, shape index: {}]
  %s8 = inlined_call_operand.hbm [shape: bf16[2,32,8], index: 8, kind: input, shape index: {}]
  %s9 = inlined_call_operand.hbm [shape: f32[2,1,8], index: 9, kind: input, shape index: {}]
  %s10 = inlined_call_operand.hbm [shape: bf16[2,8,32], index: 10, kind: input, shape index: {}]
  %s11 = inlined_call_operand.hbm [shape: f32[1,32], index: 11, kind: input, shape index: {}]
  %s12 = inlined_call_operand.hbm [shape: f32[1,32], index: 12, kind: input, shape index: {}]
  %s13 = inlined_call_operand.hbm [shape: f32[1,32], index: 13, kind: input, shape index: {}]
  %s14 = inlined_call_operand.hbm [shape: bf16[32,64], index: 14, kind: input, shape index: {}]
  %s15 = inlined_call_operand.hbm [shape: f32[1,64], index: 15, kind: input, shape index: {}]
  %s16 = inlined_call_operand.hbm [shape: bf16[64,32], index: 16, kind: input, shape index: {}]
  %s17 = inlined_call_operand.hbm [shape: f32[1,32], index: 17, kind: input, shape index: {}]
  %s18 = inlined_call_operand.hbm [shape: f32[1,32], index: 18, kind: input, shape index: {}]
  %s19 = inlined_call_operand.hbm [shape: f32[1,32], index: 19, kind: input, shape index: {}]
  %s20 = inlined_call_operand.hbm [shape: f32[2,8,32], index: 20, kind: output, shape index: {}]
  %s21 = sld [smem:[#allocation0]]
  $region197: #{tpu_custom_call.1} parent=0
    _
  %s23 = ssub.s32 1, %s21
  %s24 = scalar_select 0, %s23, %s21
  $region1: #{tpu_custom_call.1} parent=0
    #allocation4 [shape = 'u8[8192]{0}', space=vmem, size = 0x2000, scoped, tag = 'input window, operand 0']
    #allocation5 [shape = 's32[2]{0}', space=sflag, size = 0x8, scoped, tag = 'scoped memory for tpu_custom_call.1']
    #allocation6 [shape = 's32[2]{0}', space=sflag, size = 0x8, scoped, tag = 'scoped memory for tpu_custom_call.1']
    #allocation7 [shape = 'u8[1024]{0}', space=vmem, size = 0x400, scoped, tag = 'input window, operand 1']
    #allocation8 [shape = 's32[2]{0}', space=sflag, size = 0x8, scoped, tag = 'scoped memory for tpu_custom_call.1']
    #allocation9 [shape = 'u8[2048]{0}', space=vmem, size = 0x800, scoped, tag = 'input window, operand 2, single buffered']
    #allocation10 [shape = 'u8[8192]{0}', space=vmem, size = 0x2000, scoped, tag = 'input window, operand 3']
    #allocation11 [shape = 's32[2]{0}', space=sflag, size = 0x8, scoped, tag = 'scoped memory for tpu_custom_call.1']
    #allocation12 [shape = 'u8[16384]{0}', space=vmem, size = 0x4000, scoped, tag = 'input window, operand 4, single buffered']
    #allocation13 [shape = 'u8[1024]{0}', space=vmem, size = 0x400, scoped, tag = 'input window, operand 5, single buffered']
    #allocation14 [shape = 's32[1]{0}', space=sflag, size = 0x4, scoped, tag = 'scoped memory for tpu_custom_call.1']
    #allocation15 [shape = 'u8[16384]{0}', space=vmem, size = 0x4000, scoped, tag = 'input window, operand 6, single buffered']
    #allocation16 [shape = 'u8[1024]{0}', space=vmem, size = 0x400, scoped, tag = 'input window, operand 7, single buffered']
    #allocation17 [shape = 's32[1]{0}', space=sflag, size = 0x4, scoped, tag = 'scoped memory for tpu_custom_call.1']
    #allocation18 [shape = 'u8[16384]{0}', space=vmem, size = 0x4000, scoped, tag = 'input window, operand 8, single buffered']
    #allocation19 [shape = 'u8[1024]{0}', space=vmem, size = 0x400, scoped, tag = 'input window, operand 9, single buffered']
    #allocation20 [shape = 's32[1]{0}', space=sflag, size = 0x4, scoped, tag = 'scoped memory for tpu_custom_call.1']
    #allocation21 [shape = 'u8[4096]{0}', space=vmem, size = 0x1000, scoped, tag = 'input window, operand 10, single buffered']
    #allocation22 [shape = 'u8[512]{0}', space=vmem, size = 0x400, scoped, tag = 'input window, operand 11, single buffered']
    #allocation23 [shape = 's32[1]{0}', space=sflag, size = 0x4, scoped, tag = 'scoped memory for tpu_custom_call.1']
    #allocation24 [shape = 'u8[512]{0}', space=vmem, size = 0x400, scoped, tag = 'input window, operand 12, single buffered']
    #allocation25 [shape = 'u8[512]{0}', space=vmem, size = 0x400, scoped, tag = 'input window, operand 13, single buffered']
    #allocation26 [shape = 's32[1]{0}', space=sflag, size = 0x4, scoped, tag = 'scoped memory for tpu_custom_call.1']
    #allocation27 [shape = 'u8[8192]{0}', space=vmem, size = 0x2000, scoped, tag = 'input window, operand 14, single buffered']
    #allocation28 [shape = 'u8[512]{0}', space=vmem, size = 0x400, scoped, tag = 'input window, operand 15, single buffered']
    #allocation29 [shape = 's32[1]{0}', space=sflag, size = 0x4, scoped, tag = 'scoped memory for tpu_custom_call.1']
    #allocation30 [shape = 'u8[16384]{0}', space=vmem, size = 0x4000, scoped, tag = 'input window, operand 16, single buffered']
    #allocation31 [shape = 'u8[512]{0}', space=vmem, size = 0x400, scoped, tag = 'input window, operand 17, single buffered']
    #allocation32 [shape = 's32[1]{0}', space=sflag, size = 0x4, scoped, tag = 'scoped memory for tpu_custom_call.1']
    #allocation33 [shape = 'u8[512]{0}', space=vmem, size = 0x400, scoped, tag = 'input window, operand 18, single buffered']
    #allocation34 [shape = 'u8[512]{0}', space=vmem, size = 0x400, scoped, tag = 'input window, operand 19, single buffered']
    #allocation35 [shape = 's32[1]{0}', space=sflag, size = 0x4, scoped, tag = 'scoped memory for tpu_custom_call.1']
    #allocation36 [shape = 'u8[8192]{0}', space=vmem, size = 0x2000, scoped, tag = 'output window, operand 0']
    %25 = vsyncpa [#allocation5], 0
    %s26 = scalar_lea.sflag [#allocation5], 1
    %27 = vsyncpa %s26, 0
    %28 = vsyncpa [#allocation8], 0
    %s29 = scalar_lea.sflag [#allocation8], 1
    %30 = vsyncpa %s29, 0
    %31 = vsyncpa [#allocation11], 0
    %s32 = scalar_lea.sflag [#allocation11], 1
    %33 = vsyncpa %s32, 0
    %34 = vsyncpa [#allocation14], 0
    %35 = vsyncpa [#allocation17], 0
    %36 = vsyncpa [#allocation20], 0
    %37 = vsyncpa [#allocation23], 0
    %38 = vsyncpa [#allocation26], 0
    %39 = vsyncpa [#allocation29], 0
    %40 = vsyncpa [#allocation32], 0
    %41 = vsyncpa [#allocation35], 0
    %42 = vsyncpa [#allocation6], 0
    %s43 = scalar_lea.sflag [#allocation6], 1
    %44 = vsyncpa %s43, 0
    loop: start=0, step=1, limit=4
    $region2: #{tpu_custom_call.1} parent=1 // loop_pre_header
      _
    $region3: #{tpu_custom_call.1} parent=1 // loop_header
      %s46 = sphi 0, %s50
      %p47 = scmp.ge.s32.totalorder %s46, 4
      %s53 = sphi 0, %s65
      %s54 = sphi 0, %s61
      %s55 = sphi 0, %s53
      %s56 = sphi 0, %s54
      %s57 = sphi 0, %s55
      %s58 = sphi 0, %s56
      %s68 = sphi 0, %s70
      %s71 = sphi 0, %s68
      %s72 = sphi 0, %s71
      %s88 = sphi 0, %s72
      %s94 = sphi 0, %s96
      %s97 = sphi 0, %s94
      %s98 = sphi 0, %s97
      %s114 = sphi 0, %s98
      %s120 = sphi 0, %s122
      %s123 = sphi 0, %s120
      %s124 = sphi 0, %s123
      %s140 = sphi 0, %s124
      %s148 = sphi 0, %s150
      %s151 = sphi 0, %s148
      %s152 = sphi 0, %s151
      %s168 = sphi 0, %s152
      %s172 = sphi 0, %s172
      %s174 = sphi 0, %s172
      %s175 = sphi 0, %s174
      %s189 = sphi 0, %s175
      %s193 = sphi 0, %s193
      %s195 = sphi 0, %s193
      %s196 = sphi 0, %s195
      %s210 = sphi 0, %s196
      %s214 = sphi 0, %s214
      %s216 = sphi 0, %s214
      %s217 = sphi 0, %s216
      %s231 = sphi 0, %s217
      %s235 = sphi 0, %s235
      %s237 = sphi 0, %s235
      %s238 = sphi 0, %s237
      %s252 = sphi 0, %s238
      %s256 = sphi 0, %s256
      %s258 = sphi 0, %s256
      %s259 = sphi 0, %s258
      %s273 = sphi 0, %s259
      %s277 = sphi 0, %s277
      %s279 = sphi 0, %s277
      %s280 = sphi 0, %s279
      %s294 = sphi 0, %s280
      %s298 = sphi 0, %s298
      %s300 = sphi 0, %s298
      %s301 = sphi 0, %s300
      %s315 = sphi 0, %s301
      %s319 = sphi 0, %s319
      %s321 = sphi 0, %s319
      %s322 = sphi 0, %s321
      %s336 = sphi 0, %s322
      %s340 = sphi 0, %s340
      %s342 = sphi 0, %s340
      %s343 = sphi 0, %s342
      %s357 = sphi 0, %s343
      %s361 = sphi 0, %s361
      %s363 = sphi 0, %s361
      %s364 = sphi 0, %s363
      %s378 = sphi 0, %s364
      %s382 = sphi 0, %s382
      %s384 = sphi 0, %s382
      %s385 = sphi 0, %s384
      %s399 = sphi 0, %s385
      %s403 = sphi 0, %s403
      %s405 = sphi 0, %s403
      %s406 = sphi 0, %s405
      %s420 = sphi 0, %s406
      %s424 = sphi 0, %s424
      %s426 = sphi 0, %s424
      %s427 = sphi 0, %s426
      %s441 = sphi 0, %s427
      %s445 = sphi 0, %s445
      %s447 = sphi 0, %s445
      %s448 = sphi 0, %s447
      %s462 = sphi 0, %s448
      %s466 = sphi 0, %s466
      %s468 = sphi 0, %s466
      %s469 = sphi 0, %s468
      %s483 = sphi 0, %s469
      %s487 = sphi 0, %s487
      %s489 = sphi 0, %s487
      %s490 = sphi 0, %s489
      %s504 = sphi 0, %s490
      %s512 = sphi 0, %s514
      %s515 = sphi 0, %s512
      %s516 = sphi 0, %s515
      %s532 = sphi 0, %s516
    $region4: #{tpu_custom_call.1} parent=1 // loop_header_branch
      %49 = sbr.rel (%p47) target = $region8
    $region5: #{tpu_custom_call.1} parent=1 // loop_body
      %s51 = ssub.s32 %s46, 1
      %s52 = ssub.s32 %s46, 2
      %s59 = sadd.s32 1, %s54
      %p60 = scmp.ge.s32.totalorder %s59, 1
      %s61 = scalar_select %p60, 0, %s59
      %s62 = sadd.s32 1, %s53
      %s63 = scalar_select %p60, %s62, %s53
      %p64 = scmp.ge.s32.totalorder %s63, 2
      %s65 = scalar_select %p64, 0, %s63
      %s66 = ssub.s32 %s53, %s65
      %p67 = scmp.eq.s32.totalorder %s66, 0
      %s69 = sadd.s32 %s68, 1
      %s70 = scalar_select %p67, %s68, %s69
      %p73 = pneg %p67
      %p74 = scmp.eq.s32.totalorder %s46, 1
      %p75 = por %p73, %p74
      %p76 = scmp.ne.s32.totalorder %s68, %s71
      %p77 = scmp.eq.s32.totalorder %s46, 0
      %p78 = por %p76, %p77
      %p79 = scmp.ne.s32.totalorder %s68, %s71
      %p80 = scmp.eq.s32.totalorder %s51, 1
      %p81 = por %p79, %p80
      %p82 = scmp.ne.s32.totalorder %s71, %s72
      %p83 = scmp.eq.s32.totalorder %s51, 0
      %p84 = por %p82, %p83
      %p85 = scmp.ne.s32.totalorder %s71, %s72
      %p86 = scmp.eq.s32.totalorder %s52, 1
      %p87 = por %p85, %p86
      %p89 = scmp.ne.s32.totalorder %s72, %s88
      %p90 = scmp.eq.s32.totalorder %s52, 0
      %p91 = por %p89, %p90
      %s92 = ssub.s32 %s53, %s65
      %p93 = scmp.eq.s32.totalorder %s92, 0
      %s95 = sadd.s32 %s94, 1
      %s96 = scalar_select %p93, %s94, %s95
      %p99 = pneg %p93
      %p100 = scmp.eq.s32.totalorder %s46, 1
      %p101 = por %p99, %p100
      %p102 = scmp.ne.s32.totalorder %s94, %s97
      %p103 = scmp.eq.s32.totalorder %s46, 0
      %p104 = por %p102, %p103
      %p105 = scmp.ne.s32.totalorder %s94, %s97
      %p106 = scmp.eq.s32.totalorder %s51, 1
      %p107 = por %p105, %p106
      %p108 = scmp.ne.s32.totalorder %s97, %s98
      %p109 = scmp.eq.s32.totalorder %s51, 0
      %p110 = por %p108, %p109
      %p111 = scmp.ne.s32.totalorder %s97, %s98
      %p112 = scmp.eq.s32.totalorder %s52, 1
      %p113 = por %p111, %p112
      %p115 = scmp.ne.s32.totalorder %s98, %s114
      %p116 = scmp.eq.s32.totalorder %s52, 0
      %p117 = por %p115, %p116
      %s118 = ssub.s32 %s54, %s61
      %p119 = scmp.eq.s32.totalorder %s118, 0
      %s121 = sadd.s32 %s120, 1
      %s122 = scalar_select %p119, %s120, %s121
      %p125 = pneg %p119
      %p126 = scmp.eq.s32.totalorder %s46, 1
      %p127 = por %p125, %p126
      %p128 = scmp.ne.s32.totalorder %s120, %s123
      %p129 = scmp.eq.s32.totalorder %s46, 0
      %p130 = por %p128, %p129
      %p131 = scmp.ne.s32.totalorder %s120, %s123
      %p132 = scmp.eq.s32.totalorder %s51, 1
      %p133 = por %p131, %p132
      %p134 = scmp.ne.s32.totalorder %s123, %s124
      %p135 = scmp.eq.s32.totalorder %s51, 0
      %p136 = por %p134, %p135
      %p137 = scmp.ne.s32.totalorder %s123, %s124
      %p138 = scmp.eq.s32.totalorder %s52, 1
      %p139 = por %p137, %p138
      %p141 = scmp.ne.s32.totalorder %s124, %s140
      %p142 = scmp.eq.s32.totalorder %s52, 0
      %p143 = por %p141, %p142
      %s144 = ssub.s32 %s53, %s65
      %s145 = ssub.s32 %s54, %s61
      %s146 = sor.u32 %s144, %s145
      %p147 = scmp.eq.s32.totalorder %s146, 0
      %s149 = sadd.s32 %s148, 1
      %s150 = scalar_select %p147, %s148, %s149
      %p153 = pneg %p147
      %p154 = scmp.eq.s32.totalorder %s46, 1
      %p155 = por %p153, %p154
      %p156 = scmp.ne.s32.totalorder %s148, %s151
      %p157 = scmp.eq.s32.totalorder %s46, 0
      %p158 = por %p156, %p157
      %p159 = scmp.ne.s32.totalorder %s148, %s151
      %p160 = scmp.eq.s32.totalorder %s51, 1
      %p161 = por %p159, %p160
      %p162 = scmp.ne.s32.totalorder %s151, %s152
      %p163 = scmp.eq.s32.totalorder %s51, 0
      %p164 = por %p162, %p163
      %p165 = scmp.ne.s32.totalorder %s151, %s152
      %p166 = scmp.eq.s32.totalorder %s52, 1
      %p167 = por %p165, %p166
      %p169 = scmp.ne.s32.totalorder %s152, %s168
      %p170 = scmp.eq.s32.totalorder %s52, 0
      %p171 = por %p169, %p170
      %s173 = sadd.s32 %s172, 1
      %p176 = scmp.eq.s32.totalorder %s46, 1
      %p177 = scmp.ne.s32.totalorder %s172, %s174
      %p178 = scmp.eq.s32.totalorder %s46, 0
      %p179 = por %p177, %p178
      %p180 = scmp.ne.s32.totalorder %s172, %s174
      %p181 = scmp.eq.s32.totalorder %s51, 1
      %p182 = por %p180, %p181
      %p183 = scmp.ne.s32.totalorder %s174, %s175
      %p184 = scmp.eq.s32.totalorder %s51, 0
      %p185 = por %p183, %p184
      %p186 = scmp.ne.s32.totalorder %s174, %s175
      %p187 = scmp.eq.s32.totalorder %s52, 1
      %p188 = por %p186, %p187
      %p190 = scmp.ne.s32.totalorder %s175, %s189
      %p191 = scmp.eq.s32.totalorder %s52, 0
      %p192 = por %p190, %p191
      %s194 = sadd.s32 %s193, 1
      %p197 = scmp.eq.s32.totalorder %s46, 1
      %p198 = scmp.ne.s32.totalorder %s193, %s195
      %p199 = scmp.eq.s32.totalorder %s46, 0
      %p200 = por %p198, %p199
      %p201 = scmp.ne.s32.totalorder %s193, %s195
      %p202 = scmp.eq.s32.totalorder %s51, 1
      %p203 = por %p201, %p202
      %p204 = scmp.ne.s32.totalorder %s195, %s196
      %p205 = scmp.eq.s32.totalorder %s51, 0
      %p206 = por %p204, %p205
      %p207 = scmp.ne.s32.totalorder %s195, %s196
      %p208 = scmp.eq.s32.totalorder %s52, 1
      %p209 = por %p207, %p208
      %p211 = scmp.ne.s32.totalorder %s196, %s210
      %p212 = scmp.eq.s32.totalorder %s52, 0
      %p213 = por %p211, %p212
      %s215 = sadd.s32 %s214, 1
      %p218 = scmp.eq.s32.totalorder %s46, 1
      %p219 = scmp.ne.s32.totalorder %s214, %s216
      %p220 = scmp.eq.s32.totalorder %s46, 0
      %p221 = por %p219, %p220
      %p222 = scmp.ne.s32.totalorder %s214, %s216
      %p223 = scmp.eq.s32.totalorder %s51, 1
      %p224 = por %p222, %p223
      %p225 = scmp.ne.s32.totalorder %s216, %s217
      %p226 = scmp.eq.s32.totalorder %s51, 0
      %p227 = por %p225, %p226
      %p228 = scmp.ne.s32.totalorder %s216, %s217
      %p229 = scmp.eq.s32.totalorder %s52, 1
      %p230 = por %p228, %p229
      %p232 = scmp.ne.s32.totalorder %s217, %s231
      %p233 = scmp.eq.s32.totalorder %s52, 0
      %p234 = por %p232, %p233
      %s236 = sadd.s32 %s235, 1
      %p239 = scmp.eq.s32.totalorder %s46, 1
      %p240 = scmp.ne.s32.totalorder %s235, %s237
      %p241 = scmp.eq.s32.totalorder %s46, 0
      %p242 = por %p240, %p241
      %p243 = scmp.ne.s32.totalorder %s235, %s237
      %p244 = scmp.eq.s32.totalorder %s51, 1
      %p245 = por %p243, %p244
      %p246 = scmp.ne.s32.totalorder %s237, %s238
      %p247 = scmp.eq.s32.totalorder %s51, 0
      %p248 = por %p246, %p247
      %p249 = scmp.ne.s32.totalorder %s237, %s238
      %p250 = scmp.eq.s32.totalorder %s52, 1
      %p251 = por %p249, %p250
      %p253 = scmp.ne.s32.totalorder %s238, %s252
      %p254 = scmp.eq.s32.totalorder %s52, 0
      %p255 = por %p253, %p254
      %s257 = sadd.s32 %s256, 1
      %p260 = scmp.eq.s32.totalorder %s46, 1
      %p261 = scmp.ne.s32.totalorder %s256, %s258
      %p262 = scmp.eq.s32.totalorder %s46, 0
      %p263 = por %p261, %p262
      %p264 = scmp.ne.s32.totalorder %s256, %s258
      %p265 = scmp.eq.s32.totalorder %s51, 1
      %p266 = por %p264, %p265
      %p267 = scmp.ne.s32.totalorder %s258, %s259
      %p268 = scmp.eq.s32.totalorder %s51, 0
      %p269 = por %p267, %p268
      %p270 = scmp.ne.s32.totalorder %s258, %s259
      %p271 = scmp.eq.s32.totalorder %s52, 1
      %p272 = por %p270, %p271
      %p274 = scmp.ne.s32.totalorder %s259, %s273
      %p275 = scmp.eq.s32.totalorder %s52, 0
      %p276 = por %p274, %p275
      %s278 = sadd.s32 %s277, 1
      %p281 = scmp.eq.s32.totalorder %s46, 1
      %p282 = scmp.ne.s32.totalorder %s277, %s279
      %p283 = scmp.eq.s32.totalorder %s46, 0
      %p284 = por %p282, %p283
      %p285 = scmp.ne.s32.totalorder %s277, %s279
      %p286 = scmp.eq.s32.totalorder %s51, 1
      %p287 = por %p285, %p286
      %p288 = scmp.ne.s32.totalorder %s279, %s280
      %p289 = scmp.eq.s32.totalorder %s51, 0
      %p290 = por %p288, %p289
      %p291 = scmp.ne.s32.totalorder %s279, %s280
      %p292 = scmp.eq.s32.totalorder %s52, 1
      %p293 = por %p291, %p292
      %p295 = scmp.ne.s32.totalorder %s280, %s294
      %p296 = scmp.eq.s32.totalorder %s52, 0
      %p297 = por %p295, %p296
      %s299 = sadd.s32 %s298, 1
      %p302 = scmp.eq.s32.totalorder %s46, 1
      %p303 = scmp.ne.s32.totalorder %s298, %s300
      %p304 = scmp.eq.s32.totalorder %s46, 0
      %p305 = por %p303, %p304
      %p306 = scmp.ne.s32.totalorder %s298, %s300
      %p307 = scmp.eq.s32.totalorder %s51, 1
      %p308 = por %p306, %p307
      %p309 = scmp.ne.s32.totalorder %s300, %s301
      %p310 = scmp.eq.s32.totalorder %s51, 0
      %p311 = por %p309, %p310
      %p312 = scmp.ne.s32.totalorder %s300, %s301
      %p313 = scmp.eq.s32.totalorder %s52, 1
      %p314 = por %p312, %p313
      %p316 = scmp.ne.s32.totalorder %s301, %s315
      %p317 = scmp.eq.s32.totalorder %s52, 0
      %p318 = por %p316, %p317
      %s320 = sadd.s32 %s319, 1
      %p323 = scmp.eq.s32.totalorder %s46, 1
      %p324 = scmp.ne.s32.totalorder %s319, %s321
      %p325 = scmp.eq.s32.totalorder %s46, 0
      %p326 = por %p324, %p325
      %p327 = scmp.ne.s32.totalorder %s319, %s321
      %p328 = scmp.eq.s32.totalorder %s51, 1
      %p329 = por %p327, %p328
      %p330 = scmp.ne.s32.totalorder %s321, %s322
      %p331 = scmp.eq.s32.totalorder %s51, 0
      %p332 = por %p330, %p331
      %p333 = scmp.ne.s32.totalorder %s321, %s322
      %p334 = scmp.eq.s32.totalorder %s52, 1
      %p335 = por %p333, %p334
      %p337 = scmp.ne.s32.totalorder %s322, %s336
      %p338 = scmp.eq.s32.totalorder %s52, 0
      %p339 = por %p337, %p338
      %s341 = sadd.s32 %s340, 1
      %p344 = scmp.eq.s32.totalorder %s46, 1
      %p345 = scmp.ne.s32.totalorder %s340, %s342
      %p346 = scmp.eq.s32.totalorder %s46, 0
      %p347 = por %p345, %p346
      %p348 = scmp.ne.s32.totalorder %s340, %s342
      %p349 = scmp.eq.s32.totalorder %s51, 1
      %p350 = por %p348, %p349
      %p351 = scmp.ne.s32.totalorder %s342, %s343
      %p352 = scmp.eq.s32.totalorder %s51, 0
      %p353 = por %p351, %p352
      %p354 = scmp.ne.s32.totalorder %s342, %s343
      %p355 = scmp.eq.s32.totalorder %s52, 1
      %p356 = por %p354, %p355
      %p358 = scmp.ne.s32.totalorder %s343, %s357
      %p359 = scmp.eq.s32.totalorder %s52, 0
      %p360 = por %p358, %p359
      %s362 = sadd.s32 %s361, 1
      %p365 = scmp.eq.s32.totalorder %s46, 1
      %p366 = scmp.ne.s32.totalorder %s361, %s363
      %p367 = scmp.eq.s32.totalorder %s46, 0
      %p368 = por %p366, %p367
      %p369 = scmp.ne.s32.totalorder %s361, %s363
      %p370 = scmp.eq.s32.totalorder %s51, 1
      %p371 = por %p369, %p370
      %p372 = scmp.ne.s32.totalorder %s363, %s364
      %p373 = scmp.eq.s32.totalorder %s51, 0
      %p374 = por %p372, %p373
      %p375 = scmp.ne.s32.totalorder %s363, %s364
      %p376 = scmp.eq.s32.totalorder %s52, 1
      %p377 = por %p375, %p376
      %p379 = scmp.ne.s32.totalorder %s364, %s378
      %p380 = scmp.eq.s32.totalorder %s52, 0
      %p381 = por %p379, %p380
      %s383 = sadd.s32 %s382, 1
      %p386 = scmp.eq.s32.totalorder %s46, 1
      %p387 = scmp.ne.s32.totalorder %s382, %s384
      %p388 = scmp.eq.s32.totalorder %s46, 0
      %p389 = por %p387, %p388
      %p390 = scmp.ne.s32.totalorder %s382, %s384
      %p391 = scmp.eq.s32.totalorder %s51, 1
      %p392 = por %p390, %p391
      %p393 = scmp.ne.s32.totalorder %s384, %s385
      %p394 = scmp.eq.s32.totalorder %s51, 0
      %p395 = por %p393, %p394
      %p396 = scmp.ne.s32.totalorder %s384, %s385
      %p397 = scmp.eq.s32.totalorder %s52, 1
      %p398 = por %p396, %p397
      %p400 = scmp.ne.s32.totalorder %s385, %s399
      %p401 = scmp.eq.s32.totalorder %s52, 0
      %p402 = por %p400, %p401
      %s404 = sadd.s32 %s403, 1
      %p407 = scmp.eq.s32.totalorder %s46, 1
      %p408 = scmp.ne.s32.totalorder %s403, %s405
      %p409 = scmp.eq.s32.totalorder %s46, 0
      %p410 = por %p408, %p409
      %p411 = scmp.ne.s32.totalorder %s403, %s405
      %p412 = scmp.eq.s32.totalorder %s51, 1
      %p413 = por %p411, %p412
      %p414 = scmp.ne.s32.totalorder %s405, %s406
      %p415 = scmp.eq.s32.totalorder %s51, 0
      %p416 = por %p414, %p415
      %p417 = scmp.ne.s32.totalorder %s405, %s406
      %p418 = scmp.eq.s32.totalorder %s52, 1
      %p419 = por %p417, %p418
      %p421 = scmp.ne.s32.totalorder %s406, %s420
      %p422 = scmp.eq.s32.totalorder %s52, 0
      %p423 = por %p421, %p422
      %s425 = sadd.s32 %s424, 1
      %p428 = scmp.eq.s32.totalorder %s46, 1
      %p429 = scmp.ne.s32.totalorder %s424, %s426
      %p430 = scmp.eq.s32.totalorder %s46, 0
      %p431 = por %p429, %p430
      %p432 = scmp.ne.s32.totalorder %s424, %s426
      %p433 = scmp.eq.s32.totalorder %s51, 1
      %p434 = por %p432, %p433
      %p435 = scmp.ne.s32.totalorder %s426, %s427
      %p436 = scmp.eq.s32.totalorder %s51, 0
      %p437 = por %p435, %p436
      %p438 = scmp.ne.s32.totalorder %s426, %s427
      %p439 = scmp.eq.s32.totalorder %s52, 1
      %p440 = por %p438, %p439
      %p442 = scmp.ne.s32.totalorder %s427, %s441
      %p443 = scmp.eq.s32.totalorder %s52, 0
      %p444 = por %p442, %p443
      %s446 = sadd.s32 %s445, 1
      %p449 = scmp.eq.s32.totalorder %s46, 1
      %p450 = scmp.ne.s32.totalorder %s445, %s447
      %p451 = scmp.eq.s32.totalorder %s46, 0
      %p452 = por %p450, %p451
      %p453 = scmp.ne.s32.totalorder %s445, %s447
      %p454 = scmp.eq.s32.totalorder %s51, 1
      %p455 = por %p453, %p454
      %p456 = scmp.ne.s32.totalorder %s447, %s448
      %p457 = scmp.eq.s32.totalorder %s51, 0
      %p458 = por %p456, %p457
      %p459 = scmp.ne.s32.totalorder %s447, %s448
      %p460 = scmp.eq.s32.totalorder %s52, 1
      %p461 = por %p459, %p460
      %p463 = scmp.ne.s32.totalorder %s448, %s462
      %p464 = scmp.eq.s32.totalorder %s52, 0
      %p465 = por %p463, %p464
      %s467 = sadd.s32 %s466, 1
      %p470 = scmp.eq.s32.totalorder %s46, 1
      %p471 = scmp.ne.s32.totalorder %s466, %s468
      %p472 = scmp.eq.s32.totalorder %s46, 0
      %p473 = por %p471, %p472
      %p474 = scmp.ne.s32.totalorder %s466, %s468
      %p475 = scmp.eq.s32.totalorder %s51, 1
      %p476 = por %p474, %p475
      %p477 = scmp.ne.s32.totalorder %s468, %s469
      %p478 = scmp.eq.s32.totalorder %s51, 0
      %p479 = por %p477, %p478
      %p480 = scmp.ne.s32.totalorder %s468, %s469
      %p481 = scmp.eq.s32.totalorder %s52, 1
      %p482 = por %p480, %p481
      %p484 = scmp.ne.s32.totalorder %s469, %s483
      %p485 = scmp.eq.s32.totalorder %s52, 0
      %p486 = por %p484, %p485
      %s488 = sadd.s32 %s487, 1
      %p491 = scmp.eq.s32.totalorder %s46, 1
      %p492 = scmp.ne.s32.totalorder %s487, %s489
      %p493 = scmp.eq.s32.totalorder %s46, 0
      %p494 = por %p492, %p493
      %p495 = scmp.ne.s32.totalorder %s487, %s489
      %p496 = scmp.eq.s32.totalorder %s51, 1
      %p497 = por %p495, %p496
      %p498 = scmp.ne.s32.totalorder %s489, %s490
      %p499 = scmp.eq.s32.totalorder %s51, 0
      %p500 = por %p498, %p499
      %p501 = scmp.ne.s32.totalorder %s489, %s490
      %p502 = scmp.eq.s32.totalorder %s52, 1
      %p503 = por %p501, %p502
      %p505 = scmp.ne.s32.totalorder %s490, %s504
      %p506 = scmp.eq.s32.totalorder %s52, 0
      %p507 = por %p505, %p506
      %s508 = ssub.s32 %s53, %s65
      %s509 = ssub.s32 %s54, %s61
      %s510 = sor.u32 %s508, %s509
      %p511 = scmp.eq.s32.totalorder %s510, 0
      %s513 = sadd.s32 %s512, 1
      %s514 = scalar_select %p511, %s512, %s513
      %p517 = pneg %p511
      %p518 = scmp.eq.s32.totalorder %s46, 1
      %p519 = por %p517, %p518
      %p520 = scmp.ne.s32.totalorder %s512, %s515
      %p521 = scmp.eq.s32.totalorder %s46, 0
      %p522 = por %p520, %p521
      %p523 = scmp.ne.s32.totalorder %s512, %s515
      %p524 = scmp.eq.s32.totalorder %s51, 1
      %p525 = por %p523, %p524
      %p526 = scmp.ne.s32.totalorder %s515, %s516
      %p527 = scmp.eq.s32.totalorder %s51, 0
      %p528 = por %p526, %p527
      %p529 = scmp.ne.s32.totalorder %s515, %s516
      %p530 = scmp.eq.s32.totalorder %s52, 1
      %p531 = por %p529, %p530
      %p533 = scmp.ne.s32.totalorder %s516, %s532
      %p534 = scmp.eq.s32.totalorder %s52, 0
      %p535 = por %p533, %p534
      %p536 = scmp.le.s32.totalorder 1, %s46
      %p537 = scmp.lt.s32.totalorder %s46, 3
      %p538 = pnand %p536, %p537
      %p539 = pneg %p538
      // Predicated region
      $region9: #{tpu_custom_call.1} parent=5 // pred_check
        _
      $region10: #{tpu_custom_call.1} parent=5 // pred_check_branch
        %541 = sbr.rel (%p538) target = $region12
      $region11: #{tpu_custom_call.1} parent=5 // pred_region
        %s542 = ssub.s32 %s46, 1
        // Predicated region
        $region13: #{tpu_custom_call.1} parent=11 // pred_check
          %p543 = pneg %p136
        $region14: #{tpu_custom_call.1} parent=11 // pred_check_branch
          %545 = sbr.rel (%p543) target = $region16
        $region15: #{tpu_custom_call.1} parent=11 // pred_region
          %s547 = ssub.s32 64, 64
          %548 = vsyncadd [#allocation8], %s547
          %s549 = smul.addr %s56, 64
          %s550 = scalar_lea.hbm %s2, %s549
          %s552 = sshll.u32 [#allocation9], 4
          %s553 = int_to_ptr.vmem [resolvable:$true] %s552
          %555 = dma.hbm_to_vmem [thread:$0]  %s550, 64, %s553, [#allocation8]
        $region16: #{tpu_custom_call.1} parent=11 // pred_fallthru
          _
        // Predicated region
        $region17: #{tpu_custom_call.1} parent=11 // pred_check
          %p556 = pneg %p185
        $region18: #{tpu_custom_call.1} parent=11 // pred_check_branch
          %558 = sbr.rel (%p556) target = $region20
        $region19: #{tpu_custom_call.1} parent=11 // pred_region
          %s560 = ssub.s32 512, 512
          %561 = vsyncadd [#allocation11], %s560
          %s562 = sshll.u32 [#allocation12], 4
          %s563 = int_to_ptr.vmem [resolvable:$true] %s562
          %568 = dma.hbm_to_vmem [thread:$0]  %s4, 512, %s563, [#allocation11], 64, 64, 4
        $region20: #{tpu_custom_call.1} parent=11 // pred_fallthru
          _
        // Predicated region
        $region21: #{tpu_custom_call.1} parent=11 // pred_check
          %p569 = pneg %p206
        $region22: #{tpu_custom_call.1} parent=11 // pred_check_branch
          %571 = sbr.rel (%p569) target = $region24
        $region23: #{tpu_custom_call.1} parent=11 // pred_region
          %s573 = ssub.s32 32, 32
          %574 = vsyncadd [#allocation14], %s573
          %s575 = sshll.u32 [#allocation13], 4
          %s576 = int_to_ptr.vmem [resolvable:$true] %s575
          %581 = dma.hbm_to_vmem [thread:$0]  %s5, 32, %s576, [#allocation14], 16, 16, 1
        $region24: #{tpu_custom_call.1} parent=11 // pred_fallthru
          _
        // Predicated region
        $region25: #{tpu_custom_call.1} parent=11 // pred_check
          %p582 = pneg %p227
        $region26: #{tpu_custom_call.1} parent=11 // pred_check_branch
          %584 = sbr.rel (%p582) target = $region28
        $region27: #{tpu_custom_call.1} parent=11 // pred_region
          %s586 = ssub.s32 512, 512
          %587 = vsyncadd [#allocation14], %s586
          %s588 = sshll.u32 [#allocation15], 4
          %s589 = int_to_ptr.vmem [resolvable:$true] %s588
          %594 = dma.hbm_to_vmem [thread:$0]  %s6, 512, %s589, [#allocation14], 64, 64, 4
        $region28: #{tpu_custom_call.1} parent=11 // pred_fallthru
          _
        // Predicated region
        $region29: #{tpu_custom_call.1} parent=11 // pred_check
          %p595 = pneg %p248
        $region30: #{tpu_custom_call.1} parent=11 // pred_check_branch
          %597 = sbr.rel (%p595) target = $region32
        $region31: #{tpu_custom_call.1} parent=11 // pred_region
          %s599 = ssub.s32 32, 32
          %600 = vsyncadd [#allocation17], %s599
          %s601 = sshll.u32 [#allocation16], 4
          %s602 = int_to_ptr.vmem [resolvable:$true] %s601
          %607 = dma.hbm_to_vmem [thread:$0]  %s7, 32, %s602, [#allocation17], 16, 16, 1
        $region32: #{tpu_custom_call.1} parent=11 // pred_fallthru
          _
        // Predicated region
        $region33: #{tpu_custom_call.1} parent=11 // pred_check
          %p608 = pneg %p269
        $region34: #{tpu_custom_call.1} parent=11 // pred_check_branch
          %610 = sbr.rel (%p608) target = $region36
        $region35: #{tpu_custom_call.1} parent=11 // pred_region
          %s612 = ssub.s32 512, 512
          %613 = vsyncadd [#allocation17], %s612
          %s614 = sshll.u32 [#allocation18], 4
          %s615 = int_to_ptr.vmem [resolvable:$true] %s614
          %620 = dma.hbm_to_vmem [thread:$0]  %s8, 512, %s615, [#allocation17], 64, 64, 4
        $region36: #{tpu_custom_call.1} parent=11 // pred_fallthru
          _
        // Predicated region
        $region37: #{tpu_custom_call.1} parent=11 // pred_check
          %p621 = pneg %p290
        $region38: #{tpu_custom_call.1} parent=11 // pred_check_branch
          %623 = sbr.rel (%p621) target = $region40
        $region39: #{tpu_custom_call.1} parent=11 // pred_region
          %s625 = ssub.s32 32, 32
          %626 = vsyncadd [#allocation20], %s625
          %s627 = sshll.u32 [#allocation19], 4
          %s628 = int_to_ptr.vmem [resolvable:$true] %s627
          %633 = dma.hbm_to_vmem [thread:$0]  %s9, 32, %s628, [#allocation20], 16, 16, 1
        $region40: #{tpu_custom_call.1} parent=11 // pred_fallthru
          _
        // Predicated region
        $region41: #{tpu_custom_call.1} parent=11 // pred_check
          %p634 = pneg %p311
        $region42: #{tpu_custom_call.1} parent=11 // pred_check_branch
          %636 = sbr.rel (%p634) target = $region44
        $region43: #{tpu_custom_call.1} parent=11 // pred_region
          %s638 = ssub.s32 128, 128
          %639 = vsyncadd [#allocation20], %s638
          %s640 = sshll.u32 [#allocation21], 4
          %s641 = int_to_ptr.vmem [resolvable:$true] %s640
          %646 = dma.hbm_to_vmem [thread:$0]  %s10, 128, %s641, [#allocation20], 64, 64, 4
        $region44: #{tpu_custom_call.1} parent=11 // pred_fallthru
          _
        // Predicated region
        $region45: #{tpu_custom_call.1} parent=11 // pred_check
          %p647 = pneg %p332
        $region46: #{tpu_custom_call.1} parent=11 // pred_check_branch
          %649 = sbr.rel (%p647) target = $region48
        $region47: #{tpu_custom_call.1} parent=11 // pred_region
          %s651 = ssub.s32 16, 16
          %652 = vsyncadd [#allocation23], %s651
          %s654 = sshll.u32 [#allocation22], 4
          %s655 = int_to_ptr.vmem [resolvable:$true] %s654
          %657 = dma.hbm_to_vmem [thread:$0]  %s11, 16, %s655, [#allocation23]
        $region48: #{tpu_custom_call.1} parent=11 // pred_fallthru
          _
        // Predicated region
        $region49: #{tpu_custom_call.1} parent=11 // pred_check
          %p658 = pneg %p353
        $region50: #{tpu_custom_call.1} parent=11 // pred_check_branch
          %660 = sbr.rel (%p658) target = $region52
        $region51: #{tpu_custom_call.1} parent=11 // pred_region
          %s662 = ssub.s32 16, 16
          %663 = vsyncadd [#allocation23], %s662
          %s665 = sshll.u32 [#allocation24], 4
          %s666 = int_to_ptr.vmem [resolvable:$true] %s665
          %668 = dma.hbm_to_vmem [thread:$0]  %s12, 16, %s666, [#allocation23]
        $region52: #{tpu_custom_call.1} parent=11 // pred_fallthru
          _
        // Predicated region
        $region53: #{tpu_custom_call.1} parent=11 // pred_check
          %p669 = pneg %p374
        $region54: #{tpu_custom_call.1} parent=11 // pred_check_branch
          %671 = sbr.rel (%p669) target = $region56
        $region55: #{tpu_custom_call.1} parent=11 // pred_region
          %s673 = ssub.s32 16, 16
          %674 = vsyncadd [#allocation26], %s673
          %s676 = sshll.u32 [#allocation25], 4
          %s677 = int_to_ptr.vmem [resolvable:$true] %s676
          %679 = dma.hbm_to_vmem [thread:$0]  %s13, 16, %s677, [#allocation26]
        $region56: #{tpu_custom_call.1} parent=11 // pred_fallthru
          _
        // Predicated region
        $region57: #{tpu_custom_call.1} parent=11 // pred_check
          %p680 = pneg %p395
        $region58: #{tpu_custom_call.1} parent=11 // pred_check_branch
          %682 = sbr.rel (%p680) target = $region60
        $region59: #{tpu_custom_call.1} parent=11 // pred_region
          %s684 = ssub.s32 256, 256
          %685 = vsyncadd [#allocation26], %s684
          %s686 = sshll.u32 [#allocation27], 4
          %s687 = int_to_ptr.vmem [resolvable:$true] %s686
          %692 = dma.hbm_to_vmem [thread:$0]  %s14, 256, %s687, [#allocation26], 64, 64, 4
        $region60: #{tpu_custom_call.1} parent=11 // pred_fallthru
          _
        // Predicated region
        $region61: #{tpu_custom_call.1} parent=11 // pred_check
          %p693 = pneg %p416
        $region62: #{tpu_custom_call.1} parent=11 // pred_check_branch
          %695 = sbr.rel (%p693) target = $region64
        $region63: #{tpu_custom_call.1} parent=11 // pred_region
          %s697 = ssub.s32 16, 16
          %698 = vsyncadd [#allocation29], %s697
          %s700 = sshll.u32 [#allocation28], 4
          %s701 = int_to_ptr.vmem [resolvable:$true] %s700
          %703 = dma.hbm_to_vmem [thread:$0]  %s15, 16, %s701, [#allocation29]
        $region64: #{tpu_custom_call.1} parent=11 // pred_fallthru
          _
        // Predicated region
        $region65: #{tpu_custom_call.1} parent=11 // pred_check
          %p704 = pneg %p437
        $region66: #{tpu_custom_call.1} parent=11 // pred_check_branch
          %706 = sbr.rel (%p704) target = $region68
        $region67: #{tpu_custom_call.1} parent=11 // pred_region
          %s708 = ssub.s32 512, 512
          %709 = vsyncadd [#allocation29], %s708
          %s710 = sshll.u32 [#allocation30], 4
          %s711 = int_to_ptr.vmem [resolvable:$true] %s710
          %716 = dma.hbm_to_vmem [thread:$0]  %s16, 512, %s711, [#allocation29], 64, 64, 4
        $region68: #{tpu_custom_call.1} parent=11 // pred_fallthru
          _
        // Predicated region
        $region69: #{tpu_custom_call.1} parent=11 // pred_check
          %p717 = pneg %p458
        $region70: #{tpu_custom_call.1} parent=11 // pred_check_branch
          %719 = sbr.rel (%p717) target = $region72
        $region71: #{tpu_custom_call.1} parent=11 // pred_region
          %s721 = ssub.s32 16, 16
          %722 = vsyncadd [#allocation32], %s721
          %s724 = sshll.u32 [#allocation31], 4
          %s725 = int_to_ptr.vmem [resolvable:$true] %s724
          %727 = dma.hbm_to_vmem [thread:$0]  %s17, 16, %s725, [#allocation32]
        $region72: #{tpu_custom_call.1} parent=11 // pred_fallthru
          _
        // Predicated region
        $region73: #{tpu_custom_call.1} parent=11 // pred_check
          %p728 = pneg %p479
        $region74: #{tpu_custom_call.1} parent=11 // pred_check_branch
          %730 = sbr.rel (%p728) target = $region76
        $region75: #{tpu_custom_call.1} parent=11 // pred_region
          %s732 = ssub.s32 16, 16
          %733 = vsyncadd [#allocation32], %s732
          %s735 = sshll.u32 [#allocation33], 4
          %s736 = int_to_ptr.vmem [resolvable:$true] %s735
          %738 = dma.hbm_to_vmem [thread:$0]  %s18, 16, %s736, [#allocation32]
        $region76: #{tpu_custom_call.1} parent=11 // pred_fallthru
          _
        // Predicated region
        $region77: #{tpu_custom_call.1} parent=11 // pred_check
          %p739 = pneg %p500
        $region78: #{tpu_custom_call.1} parent=11 // pred_check_branch
          %741 = sbr.rel (%p739) target = $region80
        $region79: #{tpu_custom_call.1} parent=11 // pred_region
          %s743 = ssub.s32 16, 16
          %744 = vsyncadd [#allocation35], %s743
          %s746 = sshll.u32 [#allocation34], 4
          %s747 = int_to_ptr.vmem [resolvable:$true] %s746
          %749 = dma.hbm_to_vmem [thread:$0]  %s19, 16, %s747, [#allocation35]
        $region80: #{tpu_custom_call.1} parent=11 // pred_fallthru
          _
      $region12: #{tpu_custom_call.1} parent=5 // pred_fallthru
        _
      %p750 = scmp.lt.s32.totalorder %s46, 2
      // Predicated region
      $region81: #{tpu_custom_call.1} parent=5 // pred_check
        %p751 = pneg %p750
      $region82: #{tpu_custom_call.1} parent=5 // pred_check_branch
        %753 = sbr.rel (%p751) target = $region84
      $region83: #{tpu_custom_call.1} parent=5 // pred_region
        // Predicated region
        $region85: #{tpu_custom_call.1} parent=83 // pred_check
          %p754 = pneg %p78
        $region86: #{tpu_custom_call.1} parent=83 // pred_check_branch
          %756 = sbr.rel (%p754) target = $region88
        $region87: #{tpu_custom_call.1} parent=83 // pred_region
          %s757 = sand.u32 %s68, 1
          %s758 = scalar_lea.sflag [#allocation5], %s757
          %s759 = sand.u32 %s68, 1
          %s760 = smul.addr %s759, 8
          %s761 = scalar_lea.vmem [#allocation4], %s760
          %s763 = ssub.s32 128, 128
          %764 = vsyncadd %s758, %s763
          %s765 = smul.addr %s53, 128
          %s766 = scalar_lea.hbm %s0, %s765
          %s768 = sshll.u32 %s761, 4
          %s769 = int_to_ptr.vmem [resolvable:$true] %s768
          %771 = dma.hbm_to_vmem [thread:$0]  %s766, 128, %s769, %s758
        $region88: #{tpu_custom_call.1} parent=83 // pred_fallthru
          _
        // Predicated region
        $region89: #{tpu_custom_call.1} parent=83 // pred_check
          %p772 = pneg %p104
        $region90: #{tpu_custom_call.1} parent=83 // pred_check_branch
          %774 = sbr.rel (%p772) target = $region92
        $region91: #{tpu_custom_call.1} parent=83 // pred_region
          %s775 = sand.u32 %s46, 1
          %s776 = scalar_lea.sflag [#allocation8], %s775
          %s777 = sand.u32 %s94, 1
          %s778 = scalar_lea.vmem [#allocation7], %s777
          %s780 = ssub.s32 16, 16
          %781 = vsyncadd %s776, %s780
          %s782 = smul.addr %s53, 16
          %s783 = scalar_lea.hbm %s1, %s782
          %s785 = sshll.u32 %s778, 4
          %s786 = int_to_ptr.vmem [resolvable:$true] %s785
          %788 = dma.hbm_to_vmem [thread:$0]  %s783, 16, %s786, %s776
        $region92: #{tpu_custom_call.1} parent=83 // pred_fallthru
          _
        // Predicated region
        $region93: #{tpu_custom_call.1} parent=83 // pred_check
          %p789 = pneg %p158
        $region94: #{tpu_custom_call.1} parent=83 // pred_check_branch
          %791 = sbr.rel (%p789) target = $region96
        $region95: #{tpu_custom_call.1} parent=83 // pred_region
          %s792 = sand.u32 %s46, 1
          %s793 = scalar_lea.sflag [#allocation11], %s792
          %s794 = sand.u32 %s148, 1
          %s795 = smul.addr %s794, 8
          %s796 = scalar_lea.vmem [#allocation10], %s795
          %s798 = ssub.s32 128, 128
          %799 = vsyncadd %s793, %s798
          %s800 = sadd.s32 %s54, %s53
          %s801 = smul.addr %s800, 128
          %s802 = scalar_lea.hbm %s3, %s801
          %s804 = sshll.u32 %s796, 4
          %s805 = int_to_ptr.vmem [resolvable:$true] %s804
          %807 = dma.hbm_to_vmem [thread:$0]  %s802, 128, %s805, %s793
        $region96: #{tpu_custom_call.1} parent=83 // pred_fallthru
          _
      $region84: #{tpu_custom_call.1} parent=5 // pred_fallthru
        _
      %p808 = scmp.le.s32.totalorder 1, %s46
      %p809 = scmp.lt.s32.totalorder %s46, 3
      %p810 = pnand %p808, %p809
      %p811 = pneg %p810
      // Predicated region
      $region97: #{tpu_custom_call.1} parent=5 // pred_check
        _
      $region98: #{tpu_custom_call.1} parent=5 // pred_check_branch
        %813 = sbr.rel (%p810) target = $region100
      $region99: #{tpu_custom_call.1} parent=5 // pred_region
        %s814 = ssub.s32 %s46, 1
        %s815 = sand.u32 %s71, 1
        %s816 = scalar_lea.sflag [#allocation5], %s815
        %s817 = sand.u32 %s71, 1
        %s818 = smul.addr %s817, 8
        %s819 = scalar_lea.vmem [#allocation4], %s818
        // Predicated region
        $region101: #{tpu_custom_call.1} parent=99 // pred_check
          %p820 = pneg %p84
        $region102: #{tpu_custom_call.1} parent=99 // pred_check_branch
          %822 = sbr.rel (%p820) target = $region104
        $region103: #{tpu_custom_call.1} parent=99 // pred_region
          %823 = dma.done %s816, 128
        $region104: #{tpu_custom_call.1} parent=99 // pred_fallthru
          _
        %s824 = sand.u32 %s51, 1
        %s825 = scalar_lea.sflag [#allocation8], %s824
        %s826 = sand.u32 %s97, 1
        %s827 = scalar_lea.vmem [#allocation7], %s826
        // Predicated region
        $region105: #{tpu_custom_call.1} parent=99 // pred_check
          %p828 = pneg %p110
        $region106: #{tpu_custom_call.1} parent=99 // pred_check_branch
          %830 = sbr.rel (%p828) target = $region108
        $region107: #{tpu_custom_call.1} parent=99 // pred_region
          %831 = dma.done %s825, 16
        $region108: #{tpu_custom_call.1} parent=99 // pred_fallthru
          _
        // Predicated region
        $region109: #{tpu_custom_call.1} parent=99 // pred_check
          %p832 = pneg %p136
        $region110: #{tpu_custom_call.1} parent=99 // pred_check_branch
          %834 = sbr.rel (%p832) target = $region112
        $region111: #{tpu_custom_call.1} parent=99 // pred_region
          %835 = dma.done [#allocation8], 64
        $region112: #{tpu_custom_call.1} parent=99 // pred_fallthru
          _
        %s836 = sand.u32 %s51, 1
        %s837 = scalar_lea.sflag [#allocation11], %s836
        %s838 = sand.u32 %s151, 1
        %s839 = smul.addr %s838, 8
        %s840 = scalar_lea.vmem [#allocation10], %s839
        // Predicated region
        $region113: #{tpu_custom_call.1} parent=99 // pred_check
          %p841 = pneg %p164
        $region114: #{tpu_custom_call.1} parent=99 // pred_check_branch
          %843 = sbr.rel (%p841) target = $region116
        $region115: #{tpu_custom_call.1} parent=99 // pred_region
          %844 = dma.done %s837, 128
        $region116: #{tpu_custom_call.1} parent=99 // pred_fallthru
          _
        // Predicated region
        $region117: #{tpu_custom_call.1} parent=99 // pred_check
          %p845 = pneg %p185
        $region118: #{tpu_custom_call.1} parent=99 // pred_check_branch
          %847 = sbr.rel (%p845) target = $region120
        $region119: #{tpu_custom_call.1} parent=99 // pred_region
          %848 = dma.done [#allocation11], 512
        $region120: #{tpu_custom_call.1} parent=99 // pred_fallthru
          _
        // Predicated region
        $region121: #{tpu_custom_call.1} parent=99 // pred_check
          %p849 = pneg %p206
        $region122: #{tpu_custom_call.1} parent=99 // pred_check_branch
          %851 = sbr.rel (%p849) target = $region124
        $region123: #{tpu_custom_call.1} parent=99 // pred_region
          %852 = dma.done [#allocation14], 32
        $region124: #{tpu_custom_call.1} parent=99 // pred_fallthru
          _
        // Predicated region
        $region125: #{tpu_custom_call.1} parent=99 // pred_check
          %p853 = pneg %p227
        $region126: #{tpu_custom_call.1} parent=99 // pred_check_branch
          %855 = sbr.rel (%p853) target = $region128
        $region127: #{tpu_custom_call.1} parent=99 // pred_region
          %856 = dma.done [#allocation14], 512
        $region128: #{tpu_custom_call.1} parent=99 // pred_fallthru
          _
        // Predicated region
        $region129: #{tpu_custom_call.1} parent=99 // pred_check
          %p857 = pneg %p248
        $region130: #{tpu_custom_call.1} parent=99 // pred_check_branch
          %859 = sbr.rel (%p857) target = $region132
        $region131: #{tpu_custom_call.1} parent=99 // pred_region
          %860 = dma.done [#allocation17], 32
        $region132: #{tpu_custom_call.1} parent=99 // pred_fallthru
          _
        // Predicated region
        $region133: #{tpu_custom_call.1} parent=99 // pred_check
          %p861 = pneg %p269
        $region134: #{tpu_custom_call.1} parent=99 // pred_check_branch
          %863 = sbr.rel (%p861) target = $region136
        $region135: #{tpu_custom_call.1} parent=99 // pred_region
          %864 = dma.done [#allocation17], 512
        $region136: #{tpu_custom_call.1} parent=99 // pred_fallthru
          _
        // Predicated region
        $region137: #{tpu_custom_call.1} parent=99 // pred_check
          %p865 = pneg %p290
        $region138: #{tpu_custom_call.1} parent=99 // pred_check_branch
          %867 = sbr.rel (%p865) target = $region140
        $region139: #{tpu_custom_call.1} parent=99 // pred_region
          %868 = dma.done [#allocation20], 32
        $region140: #{tpu_custom_call.1} parent=99 // pred_fallthru
          _
        // Predicated region
        $region141: #{tpu_custom_call.1} parent=99 // pred_check
          %p869 = pneg %p311
        $region142: #{tpu_custom_call.1} parent=99 // pred_check_branch
          %871 = sbr.rel (%p869) target = $region144
        $region143: #{tpu_custom_call.1} parent=99 // pred_region
          %872 = dma.done [#allocation20], 128
        $region144: #{tpu_custom_call.1} parent=99 // pred_fallthru
          _
        // Predicated region
        $region145: #{tpu_custom_call.1} parent=99 // pred_check
          %p873 = pneg %p332
        $region146: #{tpu_custom_call.1} parent=99 // pred_check_branch
          %875 = sbr.rel (%p873) target = $region148
        $region147: #{tpu_custom_call.1} parent=99 // pred_region
          %876 = dma.done [#allocation23], 16
        $region148: #{tpu_custom_call.1} parent=99 // pred_fallthru
          _
        // Predicated region
        $region149: #{tpu_custom_call.1} parent=99 // pred_check
          %p877 = pneg %p353
        $region150: #{tpu_custom_call.1} parent=99 // pred_check_branch
          %879 = sbr.rel (%p877) target = $region152
        $region151: #{tpu_custom_call.1} parent=99 // pred_region
          %880 = dma.done [#allocation23], 16
        $region152: #{tpu_custom_call.1} parent=99 // pred_fallthru
          _
        // Predicated region
        $region153: #{tpu_custom_call.1} parent=99 // pred_check
          %p881 = pneg %p374
        $region154: #{tpu_custom_call.1} parent=99 // pred_check_branch
          %883 = sbr.rel (%p881) target = $region156
        $region155: #{tpu_custom_call.1} parent=99 // pred_region
          %884 = dma.done [#allocation26], 16
        $region156: #{tpu_custom_call.1} parent=99 // pred_fallthru
          _
        // Predicated region
        $region157: #{tpu_custom_call.1} parent=99 // pred_check
          %p885 = pneg %p395
        $region158: #{tpu_custom_call.1} parent=99 // pred_check_branch
          %887 = sbr.rel (%p885) target = $region160
        $region159: #{tpu_custom_call.1} parent=99 // pred_region
          %888 = dma.done [#allocation26], 256
        $region160: #{tpu_custom_call.1} parent=99 // pred_fallthru
          _
        // Predicated region
        $region161: #{tpu_custom_call.1} parent=99 // pred_check
          %p889 = pneg %p416
        $region162: #{tpu_custom_call.1} parent=99 // pred_check_branch
          %891 = sbr.rel (%p889) target = $region164
        $region163: #{tpu_custom_call.1} parent=99 // pred_region
          %892 = dma.done [#allocation29], 16
        $region164: #{tpu_custom_call.1} parent=99 // pred_fallthru
          _
        // Predicated region
        $region165: #{tpu_custom_call.1} parent=99 // pred_check
          %p893 = pneg %p437
        $region166: #{tpu_custom_call.1} parent=99 // pred_check_branch
          %895 = sbr.rel (%p893) target = $region168
        $region167: #{tpu_custom_call.1} parent=99 // pred_region
          %896 = dma.done [#allocation29], 512
        $region168: #{tpu_custom_call.1} parent=99 // pred_fallthru
          _
        // Predicated region
        $region169: #{tpu_custom_call.1} parent=99 // pred_check
          %p897 = pneg %p458
        $region170: #{tpu_custom_call.1} parent=99 // pred_check_branch
          %899 = sbr.rel (%p897) target = $region172
        $region171: #{tpu_custom_call.1} parent=99 // pred_region
          %900 = dma.done [#allocation32], 16
        $region172: #{tpu_custom_call.1} parent=99 // pred_fallthru
          _
        // Predicated region
        $region173: #{tpu_custom_call.1} parent=99 // pred_check
          %p901 = pneg %p479
        $region174: #{tpu_custom_call.1} parent=99 // pred_check_branch
          %903 = sbr.rel (%p901) target = $region176
        $region175: #{tpu_custom_call.1} parent=99 // pred_region
          %904 = dma.done [#allocation32], 16
        $region176: #{tpu_custom_call.1} parent=99 // pred_fallthru
          _
        // Predicated region
        $region177: #{tpu_custom_call.1} parent=99 // pred_check
          %p905 = pneg %p500
        $region178: #{tpu_custom_call.1} parent=99 // pred_check_branch
          %907 = sbr.rel (%p905) target = $region180
        $region179: #{tpu_custom_call.1} parent=99 // pred_region
          %908 = dma.done [#allocation35], 16
        $region180: #{tpu_custom_call.1} parent=99 // pred_fallthru
          _
        %s909 = sand.u32 %s71, 1
        %s910 = scalar_lea.sflag [#allocation5], %s909
        %s911 = sand.u32 %s71, 1
        %s912 = smul.addr %s911, 8
        %s913 = scalar_lea.vmem [#allocation4], %s912
        %p914 = pneg %p84
        %p915 = pneg %p81
        %s916 = sand.u32 %s51, 1
        %s917 = scalar_lea.sflag [#allocation8], %s916
        %s918 = sand.u32 %s97, 1
        %s919 = scalar_lea.vmem [#allocation7], %s918
        %p920 = pneg %p110
        %p921 = pneg %p107
        %p922 = pneg %p136
        %p923 = pneg %p133
        %s924 = sand.u32 %s51, 1
        %s925 = scalar_lea.sflag [#allocation11], %s924
        %s926 = sand.u32 %s151, 1
        %s927 = smul.addr %s926, 8
        %s928 = scalar_lea.vmem [#allocation10], %s927
        %p929 = pneg %p164
        %p930 = pneg %p161
        %p931 = pneg %p185
        %p932 = pneg %p182
        %p933 = pneg %p206
        %p934 = pneg %p203
        %p935 = pneg %p227
        %p936 = pneg %p224
        %p937 = pneg %p248
        %p938 = pneg %p245
        %p939 = pneg %p269
        %p940 = pneg %p266
        %p941 = pneg %p290
        %p942 = pneg %p287
        %p943 = pneg %p311
        %p944 = pneg %p308
        %p945 = pneg %p332
        %p946 = pneg %p329
        %p947 = pneg %p353
        %p948 = pneg %p350
        %p949 = pneg %p374
        %p950 = pneg %p371
        %p951 = pneg %p395
        %p952 = pneg %p392
        %p953 = pneg %p416
        %p954 = pneg %p413
        %p955 = pneg %p437
        %p956 = pneg %p434
        %p957 = pneg %p458
        %p958 = pneg %p455
        %p959 = pneg %p479
        %p960 = pneg %p476
        %p961 = pneg %p500
        %p962 = pneg %p497
        %p963 = pneg %p528
        %p964 = pneg %p525
        %s965 = sand.u32 %s515, 1
        %s966 = scalar_lea.sflag [#allocation6], %s965
        %s967 = sand.u32 %s515, 1
        %s968 = smul.addr %s967, 8
        %s969 = scalar_lea.vmem [#allocation36], %s968
        %p971 = scmp.eq.s32.totalorder %s56, 0
        // Predicated region
        $region181: #{tpu_custom_call.1} parent=99 // pred_check
          %p972 = pneg %p971
        $region182: #{tpu_custom_call.1} parent=99 // pred_check_branch
          %974 = sbr.rel (%p972) target = $region184
        $region183: #{tpu_custom_call.1} parent=99 // pred_region
          %v975 = vld [vmem:[%s819] sm:$0xff]
          %v976 = vpack.c.bf16 %v975, %v975
          %v977 = vld [vmem:[#allocation15] sm:$0xf]
          %v978 = vld [vmem:[#allocation15 + $0x4] sm:$0xf]
          %v979 = vld [vmem:[#allocation15 + $0x8] sm:$0xf]
          %v980 = vld [vmem:[#allocation15 + $0xc] sm:$0xf]
          %v981 = vld [vmem:[#allocation16] sm:$0x1]
          %v983 = vlaneseq
          %v984 = vshrl.u32 %v983, 7
          %v985 = vsub.s32 0, %v984
          %v986 = vrot.slane %v981, %v985
          %v992 = vunpack.c.l.b16 %v977
          %v993 = vunpack.c.l.b16 %v978
          %v994 = vunpack.c.l.b16 %v979
          %v995 = vunpack.c.l.b16 %v980
          %v996 = vpack.c.b16 %v993, %v992
          %v997 = vpack.c.b16 %v995, %v994
          %vm1000 = vcmask 261120
          %v1002 = vsel %vm1000, %v976, 0
          %1004 = vmatprep.subr.bf16.mxu0 0
          %1005 = vmatpush1.bf16.msra.mxu0 %v996
          %1006 = vmatprep.subr.bf16.mxu0 0
          %1007 = vmatpush1.bf16.msra.mxu0 %v997
          %1008 = vmatprep.subr.bf16.mxu0 0
          %1009 = vmatpush1.bf16.msra.mxu0 0
          %1010 = vmatprep.subr.bf16.mxu0 0
          %1011 = vmatpush1.bf16.msra.mxu0 0
          %1012 = vmatprep.subr.bf16.mxu0 0
          %1013 = vmatpush1.bf16.msra.mxu0 0
          %1014 = vmatprep.subr.bf16.mxu0 0
          %1015 = vmatpush1.bf16.msra.mxu0 0
          %1016 = vmatprep.subr.bf16.mxu0 0
          %1017 = vmatpush1.bf16.msra.mxu0 0
          %1018 = vmatprep.subr.bf16.mxu0 0
          %1019 = vmatpush1.bf16.msra.mxu0 0
          %1020 = vmatprep.subr.bf16.mxu0 0
          %1021 = vmatpush1.bf16.msra.mxu0 0
          %1022 = vmatprep.subr.bf16.mxu0 0
          %1023 = vmatpush1.bf16.msra.mxu0 0
          %1024 = vmatprep.subr.bf16.mxu0 0
          %1025 = vmatpush1.bf16.msra.mxu0 0
          %1026 = vmatprep.subr.bf16.mxu0 0
          %1027 = vmatpush1.bf16.msra.mxu0 0
          %1028 = vmatprep.subr.bf16.mxu0 0
          %1029 = vmatpush1.bf16.msra.mxu0 0
          %1030 = vmatprep.subr.bf16.mxu0 0
          %1031 = vmatpush1.bf16.msra.mxu0 0
          %1032 = vmatprep.subr.bf16.mxu0 0
          %1033 = vmatpush1.bf16.msra.mxu0 0
          %1034 = vmatprep.subr.bf16.mxu0 0
          %1035 = vmatpush1.bf16.msra.mxu0 0
          %1036 = vmatprep.mubr.bf16.mxu0 0
          %1037 = vmatmul.mubr.bf16.gmra.mrb[0].mxu0 %v1002
          %v1038 = vpop.f32.mrb[0].mxu0
          %v1039 = vadd.f32 %v986, %v1038
          %v1040 = vpop.f32.mrb[0].mxu0
          %v1041 = vpop.f32.mrb[0].mxu0
          %v1042 = vpop.f32.mrb[0].mxu0
          %1043 = vdwg.mxu0
          %v1044 = vld [vmem:[#allocation18] sm:$0xf]
          %v1045 = vld [vmem:[#allocation18 + $0x4] sm:$0xf]
          %v1046 = vld [vmem:[#allocation18 + $0x8] sm:$0xf]
          %v1047 = vld [vmem:[#allocation18 + $0xc] sm:$0xf]
          %v1048 = vld [vmem:[#allocation19] sm:$0x1]
          %v1050 = vlaneseq
          %v1051 = vshrl.u32 %v1050, 7
          %v1052 = vsub.s32 0, %v1051
          %v1053 = vrot.slane %v1048, %v1052
          %v1059 = vunpack.c.l.b16 %v1044
          %v1060 = vunpack.c.l.b16 %v1045
          %v1061 = vunpack.c.l.b16 %v1046
          %v1062 = vunpack.c.l.b16 %v1047
          %v1063 = vpack.c.b16 %v1060, %v1059
          %v1064 = vpack.c.b16 %v1062, %v1061
          %1067 = vmatprep.subr.bf16.mxu0 0
          %1068 = vmatpush1.bf16.msra.mxu0 %v1063
          %1069 = vmatprep.subr.bf16.mxu0 0
          %1070 = vmatpush1.bf16.msra.mxu0 %v1064
          %1071 = vmatprep.subr.bf16.mxu0 0
          %1072 = vmatpush1.bf16.msra.mxu0 0
          %1073 = vmatprep.subr.bf16.mxu0 0
          %1074 = vmatpush1.bf16.msra.mxu0 0
          %1075 = vmatprep.subr.bf16.mxu0 0
          %1076 = vmatpush1.bf16.msra.mxu0 0
          %1077 = vmatprep.subr.bf16.mxu0 0
          %1078 = vmatpush1.bf16.msra.mxu0 0
          %1079 = vmatprep.subr.bf16.mxu0 0
          %1080 = vmatpush1.bf16.msra.mxu0 0
          %1081 = vmatprep.subr.bf16.mxu0 0
          %1082 = vmatpush1.bf16.msra.mxu0 0
          %1083 = vmatprep.subr.bf16.mxu0 0
          %1084 = vmatpush1.bf16.msra.mxu0 0
          %1085 = vmatprep.subr.bf16.mxu0 0
          %1086 = vmatpush1.bf16.msra.mxu0 0
          %1087 = vmatprep.subr.bf16.mxu0 0
          %1088 = vmatpush1.bf16.msra.mxu0 0
          %1089 = vmatprep.subr.bf16.mxu0 0
          %1090 = vmatpush1.bf16.msra.mxu0 0
          %1091 = vmatprep.subr.bf16.mxu0 0
          %1092 = vmatpush1.bf16.msra.mxu0 0
          %1093 = vmatprep.subr.bf16.mxu0 0
          %1094 = vmatpush1.bf16.msra.mxu0 0
          %1095 = vmatprep.subr.bf16.mxu0 0
          %1096 = vmatpush1.bf16.msra.mxu0 0
          %1097 = vmatprep.subr.bf16.mxu0 0
          %1098 = vmatpush1.bf16.msra.mxu0 0
          %1099 = vmatprep.mubr.bf16.mxu0 0
          %1100 = vmatmul.mubr.bf16.gmra.mrb[0].mxu0 %v1002
          %v1101 = vpop.f32.mrb[0].mxu0
          %v1102 = vadd.f32 %v1053, %v1101
          %v1103 = vpop.f32.mrb[0].mxu0
          %v1104 = vpop.f32.mrb[0].mxu0
          %v1105 = vpop.f32.mrb[0].mxu0
          %1106 = vdwg.mxu0
          %v1107 = vpack.c.bf16 %v1039, %v1039
          %vm1108 = vcmask 257024
          %1109 = vst.msk [vmem:[#allocation2] sm:$0xf] %vm1108, %v1107
          %v1110 = vpack.c.bf16 %v1102, %v1102
          %vm1111 = vcmask 60416
          %1112 = vst.msk [vmem:[#allocation3] sm:$0xf] %vm1111, %v1110
          %s1113 = scalar_lea.vmem [#allocation15], 16
          %v1114 = vld [vmem:[%s1113] sm:$0xf]
          %v1115 = vld [vmem:[%s1113 + $0x4] sm:$0xf]
          %v1116 = vld [vmem:[%s1113 + $0x8] sm:$0xf]
          %v1117 = vld [vmem:[%s1113 + $0xc] sm:$0xf]
          %s1118 = scalar_lea.vmem [#allocation16], 1
          %v1119 = vld [vmem:[%s1118] sm:$0x1]
          %v1121 = vlaneseq
          %v1122 = vshrl.u32 %v1121, 7
          %v1123 = vsub.s32 0, %v1122
          %v1124 = vrot.slane %v1119, %v1123
          %v1130 = vunpack.c.l.b16 %v1114
          %v1131 = vunpack.c.l.b16 %v1115
          %v1132 = vunpack.c.l.b16 %v1116
          %v1133 = vunpack.c.l.b16 %v1117
          %v1134 = vpack.c.b16 %v1131, %v1130
          %v1135 = vpack.c.b16 %v1133, %v1132
          %1138 = vmatprep.subr.bf16.mxu0 0
          %1139 = vmatpush1.bf16.msra.mxu0 %v1134
          %1140 = vmatprep.subr.bf16.mxu0 0
          %1141 = vmatpush1.bf16.msra.mxu0 %v1135
          %1142 = vmatprep.subr.bf16.mxu0 0
          %1143 = vmatpush1.bf16.msra.mxu0 0
          %1144 = vmatprep.subr.bf16.mxu0 0
          %1145 = vmatpush1.bf16.msra.mxu0 0
          %1146 = vmatprep.subr.bf16.mxu0 0
          %1147 = vmatpush1.bf16.msra.mxu0 0
          %1148 = vmatprep.subr.bf16.mxu0 0
          %1149 = vmatpush1.bf16.msra.mxu0 0
          %1150 = vmatprep.subr.bf16.mxu0 0
          %1151 = vmatpush1.bf16.msra.mxu0 0
          %1152 = vmatprep.subr.bf16.mxu0 0
          %1153 = vmatpush1.bf16.msra.mxu0 0
          %1154 = vmatprep.subr.bf16.mxu0 0
          %1155 = vmatpush1.bf16.msra.mxu0 0
          %1156 = vmatprep.subr.bf16.mxu0 0
          %1157 = vmatpush1.bf16.msra.mxu0 0
          %1158 = vmatprep.subr.bf16.mxu0 0
          %1159 = vmatpush1.bf16.msra.mxu0 0
          %1160 = vmatprep.subr.bf16.mxu0 0
          %1161 = vmatpush1.bf16.msra.mxu0 0
          %1162 = vmatprep.subr.bf16.mxu0 0
          %1163 = vmatpush1.bf16.msra.mxu0 0
          %1164 = vmatprep.subr.bf16.mxu0 0
          %1165 = vmatpush1.bf16.msra.mxu0 0
          %1166 = vmatprep.subr.bf16.mxu0 0
          %1167 = vmatpush1.bf16.msra.mxu0 0
          %1168 = vmatprep.subr.bf16.mxu0 0
          %1169 = vmatpush1.bf16.msra.mxu0 0
          %1170 = vmatprep.mubr.bf16.mxu0 0
          %1171 = vmatmul.mubr.bf16.gmra.mrb[0].mxu0 %v1002
          %v1172 = vpop.f32.mrb[0].mxu0
          %v1173 = vadd.f32 %v1124, %v1172
          %v1174 = vpop.f32.mrb[0].mxu0
          %v1175 = vpop.f32.mrb[0].mxu0
          %v1176 = vpop.f32.mrb[0].mxu0
          %1177 = vdwg.mxu0
          %s1178 = scalar_lea.vmem [#allocation18], 16
          %v1179 = vld [vmem:[%s1178] sm:$0xf]
          %v1180 = vld [vmem:[%s1178 + $0x4] sm:$0xf]
          %v1181 = vld [vmem:[%s1178 + $0x8] sm:$0xf]
          %v1182 = vld [vmem:[%s1178 + $0xc] sm:$0xf]
          %s1183 = scalar_lea.vmem [#allocation19], 1
          %v1184 = vld [vmem:[%s1183] sm:$0x1]
          %v1186 = vlaneseq
          %v1187 = vshrl.u32 %v1186, 7
          %v1188 = vsub.s32 0, %v1187
          %v1189 = vrot.slane %v1184, %v1188
          %v1195 = vunpack.c.l.b16 %v1179
          %v1196 = vunpack.c.l.b16 %v1180
          %v1197 = vunpack.c.l.b16 %v1181
          %v1198 = vunpack.c.l.b16 %v1182
          %v1199 = vpack.c.b16 %v1196, %v1195
          %v1200 = vpack.c.b16 %v1198, %v1197
          %1203 = vmatprep.subr.bf16.mxu0 0
          %1204 = vmatpush1.bf16.msra.mxu0 %v1199
          %1205 = vmatprep.subr.bf16.mxu0 0
          %1206 = vmatpush1.bf16.msra.mxu0 %v1200
          %1207 = vmatprep.subr.bf16.mxu0 0
          %1208 = vmatpush1.bf16.msra.mxu0 0
          %1209 = vmatprep.subr.bf16.mxu0 0
          %1210 = vmatpush1.bf16.msra.mxu0 0
          %1211 = vmatprep.subr.bf16.mxu0 0
          %1212 = vmatpush1.bf16.msra.mxu0 0
          %1213 = vmatprep.subr.bf16.mxu0 0
          %1214 = vmatpush1.bf16.msra.mxu0 0
          %1215 = vmatprep.subr.bf16.mxu0 0
          %1216 = vmatpush1.bf16.msra.mxu0 0
          %1217 = vmatprep.subr.bf16.mxu0 0
          %1218 = vmatpush1.bf16.msra.mxu0 0
          %1219 = vmatprep.subr.bf16.mxu0 0
          %1220 = vmatpush1.bf16.msra.mxu0 0
          %1221 = vmatprep.subr.bf16.mxu0 0
          %1222 = vmatpush1.bf16.msra.mxu0 0
          %1223 = vmatprep.subr.bf16.mxu0 0
          %1224 = vmatpush1.bf16.msra.mxu0 0
          %1225 = vmatprep.subr.bf16.mxu0 0
          %1226 = vmatpush1.bf16.msra.mxu0 0
          %1227 = vmatprep.subr.bf16.mxu0 0
          %1228 = vmatpush1.bf16.msra.mxu0 0
          %1229 = vmatprep.subr.bf16.mxu0 0
          %1230 = vmatpush1.bf16.msra.mxu0 0
          %1231 = vmatprep.subr.bf16.mxu0 0
          %1232 = vmatpush1.bf16.msra.mxu0 0
          %1233 = vmatprep.subr.bf16.mxu0 0
          %1234 = vmatpush1.bf16.msra.mxu0 0
          %1235 = vmatprep.mubr.bf16.mxu0 0
          %1236 = vmatmul.mubr.bf16.gmra.mrb[0].mxu0 %v1002
          %v1237 = vpop.f32.mrb[0].mxu0
          %v1238 = vadd.f32 %v1189, %v1237
          %v1239 = vpop.f32.mrb[0].mxu0
          %v1240 = vpop.f32.mrb[0].mxu0
          %v1241 = vpop.f32.mrb[0].mxu0
          %1242 = vdwg.mxu0
          %v1243 = vpack.c.bf16 %v1173, %v1173
          %s1244 = scalar_lea.vmem [#allocation2], 4
          %1245 = vst.msk [vmem:[%s1244] sm:$0xf] %vm1108, %v1243
          %v1246 = vpack.c.bf16 %v1238, %v1238
          %s1247 = scalar_lea.vmem [#allocation3], 4
          %1248 = vst.msk [vmem:[%s1247] sm:$0xf] %vm1111, %v1246
        $region184: #{tpu_custom_call.1} parent=99 // pred_fallthru
          _
        %s1249 = smul.u32 %s56, 8
        %s1250 = scalar_lea.vmem %s819, %s1249 [#allocation4]
        %v1251 = vld [vmem:[%s1250] sm:$0xff]
        %v1252 = vpack.c.bf16 %v1251, %v1251
        %v1253 = vld [vmem:[#allocation12] sm:$0xf]
        %v1254 = vld [vmem:[#allocation12 + $0x4] sm:$0xf]
        %v1255 = vld [vmem:[#allocation12 + $0x8] sm:$0xf]
        %v1256 = vld [vmem:[#allocation12 + $0xc] sm:$0xf]
        %v1257 = vld [vmem:[#allocation13] sm:$0x1]
        %v1259 = vlaneseq
        %v1260 = vshrl.u32 %v1259, 7
        %v1261 = vsub.s32 0, %v1260
        %v1262 = vrot.slane %v1257, %v1261
        %v1268 = vunpack.c.l.b16 %v1253
        %v1269 = vunpack.c.l.b16 %v1254
        %v1270 = vunpack.c.l.b16 %v1255
        %v1271 = vunpack.c.l.b16 %v1256
        %v1272 = vpack.c.b16 %v1269, %v1268
        %v1273 = vpack.c.b16 %v1271, %v1270
        %vm1276 = vcmask 261120
        %v1278 = vsel %vm1276, %v1252, 0
        %1280 = vmatprep.subr.bf16.mxu0 0
        %1281 = vmatpush1.bf16.msra.mxu0 %v1272
        %1282 = vmatprep.subr.bf16.mxu0 0
        %1283 = vmatpush1.bf16.msra.mxu0 %v1273
        %1284 = vmatprep.subr.bf16.mxu0 0
        %1285 = vmatpush1.bf16.msra.mxu0 0
        %1286 = vmatprep.subr.bf16.mxu0 0
        %1287 = vmatpush1.bf16.msra.mxu0 0
        %1288 = vmatprep.subr.bf16.mxu0 0
        %1289 = vmatpush1.bf16.msra.mxu0 0
        %1290 = vmatprep.subr.bf16.mxu0 0
        %1291 = vmatpush1.bf16.msra.mxu0 0
        %1292 = vmatprep.subr.bf16.mxu0 0
        %1293 = vmatpush1.bf16.msra.mxu0 0
        %1294 = vmatprep.subr.bf16.mxu0 0
        %1295 = vmatpush1.bf16.msra.mxu0 0
        %1296 = vmatprep.subr.bf16.mxu0 0
        %1297 = vmatpush1.bf16.msra.mxu0 0
        %1298 = vmatprep.subr.bf16.mxu0 0
        %1299 = vmatpush1.bf16.msra.mxu0 0
        %1300 = vmatprep.subr.bf16.mxu0 0
        %1301 = vmatpush1.bf16.msra.mxu0 0
        %1302 = vmatprep.subr.bf16.mxu0 0
        %1303 = vmatpush1.bf16.msra.mxu0 0
        %1304 = vmatprep.subr.bf16.mxu0 0
        %1305 = vmatpush1.bf16.msra.mxu0 0
        %1306 = vmatprep.subr.bf16.mxu0 0
        %1307 = vmatpush1.bf16.msra.mxu0 0
        %1308 = vmatprep.subr.bf16.mxu0 0
        %1309 = vmatpush1.bf16.msra.mxu0 0
        %1310 = vmatprep.subr.bf16.mxu0 0
        %1311 = vmatpush1.bf16.msra.mxu0 0
        %1312 = vmatprep.mubr.bf16.mxu0 0
        %1313 = vmatmul.mubr.bf16.gmra.mrb[0].mxu0 %v1278
        %v1314 = vpop.f32.mrb[0].mxu0
        %v1315 = vadd.f32 %v1262, %v1314
        %v1316 = vpop.f32.mrb[0].mxu0
        %v1317 = vpop.f32.mrb[0].mxu0
        %v1318 = vpop.f32.mrb[0].mxu0
        %1319 = vdwg.mxu0
        %s1320 = scalar_lea.vmem [#allocation12], 16
        %v1321 = vld [vmem:[%s1320] sm:$0xf]
        %v1322 = vld [vmem:[%s1320 + $0x4] sm:$0xf]
        %v1323 = vld [vmem:[%s1320 + $0x8] sm:$0xf]
        %v1324 = vld [vmem:[%s1320 + $0xc] sm:$0xf]
        %s1325 = scalar_lea.vmem [#allocation13], 1
        %v1326 = vld [vmem:[%s1325] sm:$0x1]
        %v1328 = vlaneseq
        %v1329 = vshrl.u32 %v1328, 7
        %v1330 = vsub.s32 0, %v1329
        %v1331 = vrot.slane %v1326, %v1330
        %v1337 = vunpack.c.l.b16 %v1321
        %v1338 = vunpack.c.l.b16 %v1322
        %v1339 = vunpack.c.l.b16 %v1323
        %v1340 = vunpack.c.l.b16 %v1324
        %v1341 = vpack.c.b16 %v1338, %v1337
        %v1342 = vpack.c.b16 %v1340, %v1339
        %1345 = vmatprep.subr.bf16.mxu0 0
        %1346 = vmatpush1.bf16.msra.mxu0 %v1341
        %1347 = vmatprep.subr.bf16.mxu0 0
        %1348 = vmatpush1.bf16.msra.mxu0 %v1342
        %1349 = vmatprep.subr.bf16.mxu0 0
        %1350 = vmatpush1.bf16.msra.mxu0 0
        %1351 = vmatprep.subr.bf16.mxu0 0
        %1352 = vmatpush1.bf16.msra.mxu0 0
        %1353 = vmatprep.subr.bf16.mxu0 0
        %1354 = vmatpush1.bf16.msra.mxu0 0
        %1355 = vmatprep.subr.bf16.mxu0 0
        %1356 = vmatpush1.bf16.msra.mxu0 0
        %1357 = vmatprep.subr.bf16.mxu0 0
        %1358 = vmatpush1.bf16.msra.mxu0 0
        %1359 = vmatprep.subr.bf16.mxu0 0
        %1360 = vmatpush1.bf16.msra.mxu0 0
        %1361 = vmatprep.subr.bf16.mxu0 0
        %1362 = vmatpush1.bf16.msra.mxu0 0
        %1363 = vmatprep.subr.bf16.mxu0 0
        %1364 = vmatpush1.bf16.msra.mxu0 0
        %1365 = vmatprep.subr.bf16.mxu0 0
        %1366 = vmatpush1.bf16.msra.mxu0 0
        %1367 = vmatprep.subr.bf16.mxu0 0
        %1368 = vmatpush1.bf16.msra.mxu0 0
        %1369 = vmatprep.subr.bf16.mxu0 0
        %1370 = vmatpush1.bf16.msra.mxu0 0
        %1371 = vmatprep.subr.bf16.mxu0 0
        %1372 = vmatpush1.bf16.msra.mxu0 0
        %1373 = vmatprep.subr.bf16.mxu0 0
        %1374 = vmatpush1.bf16.msra.mxu0 0
        %1375 = vmatprep.subr.bf16.mxu0 0
        %1376 = vmatpush1.bf16.msra.mxu0 0
        %1377 = vmatprep.mubr.bf16.mxu0 0
        %1378 = vmatmul.mubr.bf16.gmra.mrb[0].mxu0 %v1278
        %v1379 = vpop.f32.mrb[0].mxu0
        %v1380 = vadd.f32 %v1331, %v1379
        %v1381 = vpop.f32.mrb[0].mxu0
        %v1382 = vpop.f32.mrb[0].mxu0
        %v1383 = vpop.f32.mrb[0].mxu0
        %1384 = vdwg.mxu0
        %v1385 = vpack.c.bf16 %v1315, %v1315
        %v1386 = vpack.c.bf16 %v1380, %v1380
        %v1387 = vld [vmem:[#allocation2] sm:$0xf]
        %v1388 = vld [vmem:[#allocation2 + $0x4] sm:$0xf]
        %v1389 = vld [vmem:[#allocation3] sm:$0xf]
        %v1390 = vld [vmem:[#allocation3 + $0x4] sm:$0xf]
        %v1391 = vld [vmem:[#allocation9] sm:$0xf]
        %v1392 = vunpack.c.l.bf16 %v1391
        %v1394 = vsel %vm1276, %v1385, 0
        %v1397 = vsel %vm1276, %v1387, 0
        %1399 = vmatprep.subr.bf16.mxu0 0
        %1400 = vmatpush1.bf16.xpose.msra.mxu0 %v1397
        %1401 = vmatprep.subr.bf16.mxu0 0
        %1402 = vmatpush1.bf16.xpose.msra.mxu0 0
        %1403 = vmatprep.subr.bf16.mxu0 0
        %1404 = vmatpush1.bf16.xpose.msra.mxu0 0
        %1405 = vmatprep.subr.bf16.mxu0 0
        %1406 = vmatpush1.bf16.xpose.msra.mxu0 0
        %1407 = vmatprep.subr.bf16.mxu0 0
        %1408 = vmatpush1.bf16.xpose.msra.mxu0 0
        %1409 = vmatprep.subr.bf16.mxu0 0
        %1410 = vmatpush1.bf16.xpose.msra.mxu0 0
        %1411 = vmatprep.subr.bf16.mxu0 0
        %1412 = vmatpush1.bf16.xpose.msra.mxu0 0
        %1413 = vmatprep.subr.bf16.mxu0 0
        %1414 = vmatpush1.bf16.xpose.msra.mxu0 0
        %1415 = vmatprep.subr.bf16.mxu0 0
        %1416 = vmatpush1.bf16.xpose.msra.mxu0 0
        %1417 = vmatprep.subr.bf16.mxu0 0
        %1418 = vmatpush1.bf16.xpose.msra.mxu0 0
        %1419 = vmatprep.subr.bf16.mxu0 0
        %1420 = vmatpush1.bf16.xpose.msra.mxu0 0
        %1421 = vmatprep.subr.bf16.mxu0 0
        %1422 = vmatpush1.bf16.xpose.msra.mxu0 0
        %1423 = vmatprep.subr.bf16.mxu0 0
        %1424 = vmatpush1.bf16.xpose.msra.mxu0 0
        %1425 = vmatprep.subr.bf16.mxu0 0
        %1426 = vmatpush1.bf16.xpose.msra.mxu0 0
        %1427 = vmatprep.subr.bf16.mxu0 0
        %1428 = vmatpush1.bf16.xpose.msra.mxu0 0
        %1429 = vmatprep.subr.bf16.mxu0 0
        %1430 = vmatpush1.bf16.xpose.msra.mxu0 0
        %1431 = vmatprep.mubr.bf16.mxu0 0
        %1432 = vmatmul.mubr.bf16.gmra.mrb[0].mxu0 %v1394
        %v1433 = vpop.f32.mrb[0].mxu0
        %v1434 = vadd.f32 %v1392, %v1433
        %v1435 = vpop.f32.mrb[0].mxu0
        %v1436 = vpop.f32.mrb[0].mxu0
        %v1437 = vpop.f32.mrb[0].mxu0
        %1438 = vdwg.mxu0
        %v1440 = vsel %vm1276, %v1386, 0
        %v1443 = vsel %vm1276, %v1388, 0
        %1445 = vmatprep.subr.bf16.mxu0 0
        %1446 = vmatpush1.bf16.xpose.msra.mxu0 %v1443
        %1447 = vmatprep.subr.bf16.mxu0 0
        %1448 = vmatpush1.bf16.xpose.msra.mxu0 0
        %1449 = vmatprep.subr.bf16.mxu0 0
        %1450 = vmatpush1.bf16.xpose.msra.mxu0 0
        %1451 = vmatprep.subr.bf16.mxu0 0
        %1452 = vmatpush1.bf16.xpose.msra.mxu0 0
        %1453 = vmatprep.subr.bf16.mxu0 0
        %1454 = vmatpush1.bf16.xpose.msra.mxu0 0
        %1455 = vmatprep.subr.bf16.mxu0 0
        %1456 = vmatpush1.bf16.xpose.msra.mxu0 0
        %1457 = vmatprep.subr.bf16.mxu0 0
        %1458 = vmatpush1.bf16.xpose.msra.mxu0 0
        %1459 = vmatprep.subr.bf16.mxu0 0
        %1460 = vmatpush1.bf16.xpose.msra.mxu0 0
        %1461 = vmatprep.subr.bf16.mxu0 0
        %1462 = vmatpush1.bf16.xpose.msra.mxu0 0
        %1463 = vmatprep.subr.bf16.mxu0 0
        %1464 = vmatpush1.bf16.xpose.msra.mxu0 0
        %1465 = vmatprep.subr.bf16.mxu0 0
        %1466 = vmatpush1.bf16.xpose.msra.mxu0 0
        %1467 = vmatprep.subr.bf16.mxu0 0
        %1468 = vmatpush1.bf16.xpose.msra.mxu0 0
        %1469 = vmatprep.subr.bf16.mxu0 0
        %1470 = vmatpush1.bf16.xpose.msra.mxu0 0
        %1471 = vmatprep.subr.bf16.mxu0 0
        %1472 = vmatpush1.bf16.xpose.msra.mxu0 0
        %1473 = vmatprep.subr.bf16.mxu0 0
        %1474 = vmatpush1.bf16.xpose.msra.mxu0 0
        %1475 = vmatprep.subr.bf16.mxu0 0
        %1476 = vmatpush1.bf16.xpose.msra.mxu0 0
        %1477 = vmatprep.mubr.bf16.mxu0 0
        %1478 = vmatmul.mubr.bf16.gmra.mrb[0].mxu0 %v1440
        %v1479 = vpop.f32.mrb[0].mxu0
        %v1480 = vadd.f32 %v1392, %v1479
        %v1481 = vpop.f32.mrb[0].mxu0
        %v1482 = vpop.f32.mrb[0].mxu0
        %v1483 = vpop.f32.mrb[0].mxu0
        %1484 = vdwg.mxu0
        %v1485 = vld [vmem:[%s827] sm:$0x1]
        %v1486 = vunpack.c.l.bf16 %v1485
        %v1487 = vlaneseq
        %v1488 = vshrl.u32 %v1487, 7
        %v1489 = vsub.s32 0, %v1488
        %v1490 = vrot.slane %v1486, %v1489
        %v1491 = vadd.f32 %v1434, %v1490
        %v1492 = vadd.f32 %v1480, %v1490
        %vm1493 = vcmask 64512
        %v1494 = vsel %vm1493, %v1491, -inf
        %1495 = vmax.xlane.f32.xlu0 %v1494
        %v1496 = vpop.xlane.xlu0 %1495
        %v1497 = vsel %vm1493, %v1492, -inf
        %1498 = vmax.xlane.f32.xlu0 %v1497
        %v1499 = vpop.xlane.xlu0 %1498
        %v1500 = vsub.f32 %v1491, %v1496
        %v1501 = vsub.f32 %v1492, %v1499
        %v1502 = vmul.f32 %v1500, 1.442695
        %v1503 = vpow.pop %v1502
        %v1504 = vmul.f32 %v1501, 1.442695
        %v1505 = vpow.pop %v1504
        %v1506 = vsel %vm1493, %v1503, 0.0
        %1507 = vadd.xlane.f32.xlu0 %v1506
        %v1508 = vpop.xlane.xlu0 %1507
        %v1509 = vsel %vm1493, %v1505, 0.0
        %1510 = vadd.xlane.f32.xlu0 %v1509
        %v1511 = vpop.xlane.xlu0 %1510
        %v1512 = vrcp.pop %v1508
        %v1513 = vrcp.pop %v1511
        %v1514 = vmul.f32 %v1503, %v1512
        %v1515 = vmul.f32 %v1505, %v1513
        %v1516 = vpack.c.bf16 %v1514, %v1514
        %v1517 = vpack.c.bf16 %v1515, %v1515
        %v1519 = vsel %vm1493, %v1516, 0
        %vm1521 = vcmask 1043456
        %v1523 = vsel %vm1521, %v1389, 0
        %1525 = vmatprep.subr.bf16.mxu0 0
        %1526 = vmatpush1.bf16.msra.mxu0 %v1523
        %1527 = vmatprep.subr.bf16.mxu0 0
        %1528 = vmatpush1.bf16.msra.mxu0 0
        %1529 = vmatprep.subr.bf16.mxu0 0
        %1530 = vmatpush1.bf16.msra.mxu0 0
        %1531 = vmatprep.subr.bf16.mxu0 0
        %1532 = vmatpush1.bf16.msra.mxu0 0
        %1533 = vmatprep.subr.bf16.mxu0 0
        %1534 = vmatpush1.bf16.msra.mxu0 0
        %1535 = vmatprep.subr.bf16.mxu0 0
        %1536 = vmatpush1.bf16.msra.mxu0 0
        %1537 = vmatprep.subr.bf16.mxu0 0
        %1538 = vmatpush1.bf16.msra.mxu0 0
        %1539 = vmatprep.subr.bf16.mxu0 0
        %1540 = vmatpush1.bf16.msra.mxu0 0
        %1541 = vmatprep.subr.bf16.mxu0 0
        %1542 = vmatpush1.bf16.msra.mxu0 0
        %1543 = vmatprep.subr.bf16.mxu0 0
        %1544 = vmatpush1.bf16.msra.mxu0 0
        %1545 = vmatprep.subr.bf16.mxu0 0
        %1546 = vmatpush1.bf16.msra.mxu0 0
        %1547 = vmatprep.subr.bf16.mxu0 0
        %1548 = vmatpush1.bf16.msra.mxu0 0
        %1549 = vmatprep.subr.bf16.mxu0 0
        %1550 = vmatpush1.bf16.msra.mxu0 0
        %1551 = vmatprep.subr.bf16.mxu0 0
        %1552 = vmatpush1.bf16.msra.mxu0 0
        %1553 = vmatprep.subr.bf16.mxu0 0
        %1554 = vmatpush1.bf16.msra.mxu0 0
        %1555 = vmatprep.subr.bf16.mxu0 0
        %1556 = vmatpush1.bf16.msra.mxu0 0
        %1557 = vmatprep.mubr.bf16.mxu0 0
        %1558 = vmatmul.mubr.bf16.gmra.mrb[0].mxu0 %v1519
        %v1559 = vpop.f32.mrb[0].mxu0
        %v1560 = vadd.f32 0.0, %v1559
        %v1561 = vpop.f32.mrb[0].mxu0
        %v1562 = vpop.f32.mrb[0].mxu0
        %v1563 = vpop.f32.mrb[0].mxu0
        %1564 = vdwg.mxu0
        %v1566 = vsel %vm1493, %v1517, 0
        %v1569 = vsel %vm1521, %v1390, 0
        %1571 = vmatprep.subr.bf16.mxu0 0
        %1572 = vmatpush1.bf16.msra.mxu0 %v1569
        %1573 = vmatprep.subr.bf16.mxu0 0
        %1574 = vmatpush1.bf16.msra.mxu0 0
        %1575 = vmatprep.subr.bf16.mxu0 0
        %1576 = vmatpush1.bf16.msra.mxu0 0
        %1577 = vmatprep.subr.bf16.mxu0 0
        %1578 = vmatpush1.bf16.msra.mxu0 0
        %1579 = vmatprep.subr.bf16.mxu0 0
        %1580 = vmatpush1.bf16.msra.mxu0 0
        %1581 = vmatprep.subr.bf16.mxu0 0
        %1582 = vmatpush1.bf16.msra.mxu0 0
        %1583 = vmatprep.subr.bf16.mxu0 0
        %1584 = vmatpush1.bf16.msra.mxu0 0
        %1585 = vmatprep.subr.bf16.mxu0 0
        %1586 = vmatpush1.bf16.msra.mxu0 0
        %1587 = vmatprep.subr.bf16.mxu0 0
        %1588 = vmatpush1.bf16.msra.mxu0 0
        %1589 = vmatprep.subr.bf16.mxu0 0
        %1590 = vmatpush1.bf16.msra.mxu0 0
        %1591 = vmatprep.subr.bf16.mxu0 0
        %1592 = vmatpush1.bf16.msra.mxu0 0
        %1593 = vmatprep.subr.bf16.mxu0 0
        %1594 = vmatpush1.bf16.msra.mxu0 0
        %1595 = vmatprep.subr.bf16.mxu0 0
        %1596 = vmatpush1.bf16.msra.mxu0 0
        %1597 = vmatprep.subr.bf16.mxu0 0
        %1598 = vmatpush1.bf16.msra.mxu0 0
        %1599 = vmatprep.subr.bf16.mxu0 0
        %1600 = vmatpush1.bf16.msra.mxu0 0
        %1601 = vmatprep.subr.bf16.mxu0 0
        %1602 = vmatpush1.bf16.msra.mxu0 0
        %1603 = vmatprep.mubr.bf16.mxu0 0
        %1604 = vmatmul.mubr.bf16.gmra.mrb[0].mxu0 %v1566
        %v1605 = vpop.f32.mrb[0].mxu0
        %v1606 = vadd.f32 0.0, %v1605
        %v1607 = vpop.f32.mrb[0].mxu0
        %v1608 = vpop.f32.mrb[0].mxu0
        %v1609 = vpop.f32.mrb[0].mxu0
        %1610 = vdwg.mxu0
        %v1611 = vpack.c.bf16 %v1560, %v1560
        %v1612 = vpack.c.bf16 %v1606, %v1606
        %v1613 = vld [vmem:[#allocation21] sm:$0xf]
        %v1614 = vld [vmem:[#allocation21 + $0x4] sm:$0xf]
        %v1616 = vsel %vm1493, %v1611, 0
        %v1619 = vsel %vm1521, %v1613, 0
        %1621 = vmatprep.subr.bf16.mxu0 0
        %1622 = vmatpush1.bf16.msra.mxu0 %v1619
        %1623 = vmatprep.subr.bf16.mxu0 0
        %1624 = vmatpush1.bf16.msra.mxu0 0
        %1625 = vmatprep.subr.bf16.mxu0 0
        %1626 = vmatpush1.bf16.msra.mxu0 0
        %1627 = vmatprep.subr.bf16.mxu0 0
        %1628 = vmatpush1.bf16.msra.mxu0 0
        %1629 = vmatprep.subr.bf16.mxu0 0
        %1630 = vmatpush1.bf16.msra.mxu0 0
        %1631 = vmatprep.subr.bf16.mxu0 0
        %1632 = vmatpush1.bf16.msra.mxu0 0
        %1633 = vmatprep.subr.bf16.mxu0 0
        %1634 = vmatpush1.bf16.msra.mxu0 0
        %1635 = vmatprep.subr.bf16.mxu0 0
        %1636 = vmatpush1.bf16.msra.mxu0 0
        %1637 = vmatprep.subr.bf16.mxu0 0
        %1638 = vmatpush1.bf16.msra.mxu0 0
        %1639 = vmatprep.subr.bf16.mxu0 0
        %1640 = vmatpush1.bf16.msra.mxu0 0
        %1641 = vmatprep.subr.bf16.mxu0 0
        %1642 = vmatpush1.bf16.msra.mxu0 0
        %1643 = vmatprep.subr.bf16.mxu0 0
        %1644 = vmatpush1.bf16.msra.mxu0 0
        %1645 = vmatprep.subr.bf16.mxu0 0
        %1646 = vmatpush1.bf16.msra.mxu0 0
        %1647 = vmatprep.subr.bf16.mxu0 0
        %1648 = vmatpush1.bf16.msra.mxu0 0
        %1649 = vmatprep.subr.bf16.mxu0 0
        %1650 = vmatpush1.bf16.msra.mxu0 0
        %1651 = vmatprep.subr.bf16.mxu0 0
        %1652 = vmatpush1.bf16.msra.mxu0 0
        %1653 = vmatprep.mubr.bf16.mxu0 0
        %1654 = vmatmul.mubr.bf16.gmra.mrb[0].mxu0 %v1616
        %v1655 = vpop.f32.mrb[0].mxu0
        %v1656 = vadd.f32 0.0, %v1655
        %v1657 = vpop.f32.mrb[0].mxu0
        %v1658 = vpop.f32.mrb[0].mxu0
        %v1659 = vpop.f32.mrb[0].mxu0
        %1660 = vdwg.mxu0
        %v1662 = vsel %vm1493, %v1612, 0
        %v1665 = vsel %vm1521, %v1614, 0
        %1667 = vmatprep.subr.bf16.mxu0 0
        %1668 = vmatpush1.bf16.msra.mxu0 %v1665
        %1669 = vmatprep.subr.bf16.mxu0 0
        %1670 = vmatpush1.bf16.msra.mxu0 0
        %1671 = vmatprep.subr.bf16.mxu0 0
        %1672 = vmatpush1.bf16.msra.mxu0 0
        %1673 = vmatprep.subr.bf16.mxu0 0
        %1674 = vmatpush1.bf16.msra.mxu0 0
        %1675 = vmatprep.subr.bf16.mxu0 0
        %1676 = vmatpush1.bf16.msra.mxu0 0
        %1677 = vmatprep.subr.bf16.mxu0 0
        %1678 = vmatpush1.bf16.msra.mxu0 0
        %1679 = vmatprep.subr.bf16.mxu0 0
        %1680 = vmatpush1.bf16.msra.mxu0 0
        %1681 = vmatprep.subr.bf16.mxu0 0
        %1682 = vmatpush1.bf16.msra.mxu0 0
        %1683 = vmatprep.subr.bf16.mxu0 0
        %1684 = vmatpush1.bf16.msra.mxu0 0
        %1685 = vmatprep.subr.bf16.mxu0 0
        %1686 = vmatpush1.bf16.msra.mxu0 0
        %1687 = vmatprep.subr.bf16.mxu0 0
        %1688 = vmatpush1.bf16.msra.mxu0 0
        %1689 = vmatprep.subr.bf16.mxu0 0
        %1690 = vmatpush1.bf16.msra.mxu0 0
        %1691 = vmatprep.subr.bf16.mxu0 0
        %1692 = vmatpush1.bf16.msra.mxu0 0
        %1693 = vmatprep.subr.bf16.mxu0 0
        %1694 = vmatpush1.bf16.msra.mxu0 0
        %1695 = vmatprep.subr.bf16.mxu0 0
        %1696 = vmatpush1.bf16.msra.mxu0 0
        %1697 = vmatprep.subr.bf16.mxu0 0
        %1698 = vmatpush1.bf16.msra.mxu0 0
        %1699 = vmatprep.mubr.bf16.mxu0 0
        %1700 = vmatmul.mubr.bf16.gmra.mrb[0].mxu0 %v1662
        %v1701 = vpop.f32.mrb[0].mxu0
        %v1702 = vadd.f32 0.0, %v1701
        %v1703 = vpop.f32.mrb[0].mxu0
        %v1704 = vpop.f32.mrb[0].mxu0
        %v1705 = vpop.f32.mrb[0].mxu0
        %1706 = vdwg.mxu0
        %v1707 = vsel %vm1276, %v1656, 0.0
        %v1708 = vsel %vm1276, %v1702, 0.0
        %v1709 = vadd.f32 %v1707, %v1708
        %v1710 = vld [vmem:[#allocation22] sm:$0x1]
        %v1712 = vlaneseq
        %v1713 = vshrl.u32 %v1712, 7
        %v1714 = vsub.s32 0, %v1713
        %v1715 = vrot.slane %v1710, %v1714
        %v1717 = vadd.f32 %v1709, %v1715
        %v1718 = vld [vmem:[%s840] sm:$0xff]
        %1720 = vset.pattern.permute.xlu0 0
        %1721 = vperm.xlu0 %1720, %v1718
        %v1722 = vpop.permute.xlu0 %1721
        %v1724 = vmul.f32 %v1717, %v1722
        %v1725 = vadd.f32 %v1251, %v1724
        %v1726 = vsel %vm1276, %v1725, 0.0
        %1727 = vadd.xlane.f32.xlu0 %v1726
        %v1728 = vpop.xlane.xlu0 %1727
        %v1729 = vrcp.pop 32.0
        %v1730 = vmul.f32 %v1728, %v1729
        %v1731 = vsub.f32 %v1725, %v1730
        %v1732 = vmul.f32 %v1731, %v1731
        %v1733 = vsel %vm1276, %v1732, 0.0
        %1734 = vadd.xlane.f32.xlu0 %v1733
        %v1735 = vpop.xlane.xlu0 %1734
        %v1736 = vmul.f32 %v1735, %v1729
        %v1737 = vadd.f32 %v1736, 1e-05
        %v1738 = vrsqrt.pop %v1737
        %v1739 = vmul.f32 %v1731, %v1738
        %v1740 = vld [vmem:[#allocation24] sm:$0x1]
        %v1742 = vlaneseq
        %v1743 = vshrl.u32 %v1742, 7
        %v1744 = vsub.s32 0, %v1743
        %v1745 = vrot.slane %v1740, %v1744
        %v1747 = vmul.f32 %v1739, %v1745
        %v1748 = vld [vmem:[#allocation25] sm:$0x1]
        %v1750 = vlaneseq
        %v1751 = vshrl.u32 %v1750, 7
        %v1752 = vsub.s32 0, %v1751
        %v1753 = vrot.slane %v1748, %v1752
        %v1755 = vadd.f32 %v1747, %v1753
        %v1756 = vpack.c.bf16 %v1755, %v1755
        %v1757 = vld [vmem:[#allocation27] sm:$0xf]
        %v1758 = vld [vmem:[#allocation27 + $0x4] sm:$0xf]
        %v1759 = vld [vmem:[#allocation27 + $0x8] sm:$0xf]
        %v1760 = vld [vmem:[#allocation27 + $0xc] sm:$0xf]
        %v1761 = vld [vmem:[#allocation28] sm:$0x1]
        %v1763 = vlaneseq
        %v1764 = vshrl.u32 %v1763, 7
        %v1765 = vsub.s32 0, %v1764
        %v1766 = vrot.slane %v1761, %v1765
        %v1772 = vunpack.c.l.b16 %v1757
        %v1773 = vunpack.c.l.b16 %v1758
        %v1774 = vunpack.c.l.b16 %v1759
        %v1775 = vunpack.c.l.b16 %v1760
        %v1776 = vpack.c.b16 %v1773, %v1772
        %v1777 = vpack.c.b16 %v1775, %v1774
        %v1781 = vsel %vm1276, %v1756, 0
        %1783 = vmatprep.subr.bf16.mxu0 0
        %1784 = vmatpush1.bf16.msra.mxu0 %v1776
        %1785 = vmatprep.subr.bf16.mxu0 0
        %1786 = vmatpush1.bf16.msra.mxu0 %v1777
        %1787 = vmatprep.subr.bf16.mxu0 0
        %1788 = vmatpush1.bf16.msra.mxu0 0
        %1789 = vmatprep.subr.bf16.mxu0 0
        %1790 = vmatpush1.bf16.msra.mxu0 0
        %1791 = vmatprep.subr.bf16.mxu0 0
        %1792 = vmatpush1.bf16.msra.mxu0 0
        %1793 = vmatprep.subr.bf16.mxu0 0
        %1794 = vmatpush1.bf16.msra.mxu0 0
        %1795 = vmatprep.subr.bf16.mxu0 0
        %1796 = vmatpush1.bf16.msra.mxu0 0
        %1797 = vmatprep.subr.bf16.mxu0 0
        %1798 = vmatpush1.bf16.msra.mxu0 0
        %1799 = vmatprep.subr.bf16.mxu0 0
        %1800 = vmatpush1.bf16.msra.mxu0 0
        %1801 = vmatprep.subr.bf16.mxu0 0
        %1802 = vmatpush1.bf16.msra.mxu0 0
        %1803 = vmatprep.subr.bf16.mxu0 0
        %1804 = vmatpush1.bf16.msra.mxu0 0
        %1805 = vmatprep.subr.bf16.mxu0 0
        %1806 = vmatpush1.bf16.msra.mxu0 0
        %1807 = vmatprep.subr.bf16.mxu0 0
        %1808 = vmatpush1.bf16.msra.mxu0 0
        %1809 = vmatprep.subr.bf16.mxu0 0
        %1810 = vmatpush1.bf16.msra.mxu0 0
        %1811 = vmatprep.subr.bf16.mxu0 0
        %1812 = vmatpush1.bf16.msra.mxu0 0
        %1813 = vmatprep.subr.bf16.mxu0 0
        %1814 = vmatpush1.bf16.msra.mxu0 0
        %1815 = vmatprep.mubr.bf16.mxu0 0
        %1816 = vmatmul.mubr.bf16.gmra.mrb[0].mxu0 %v1781
        %v1817 = vpop.f32.mrb[0].mxu0
        %v1818 = vadd.f32 %v1766, %v1817
        %v1819 = vpop.f32.mrb[0].mxu0
        %v1820 = vpop.f32.mrb[0].mxu0
        %v1821 = vpop.f32.mrb[0].mxu0
        %1822 = vdwg.mxu0
        %v1823 = vmax.f32 %v1818, 0.0
        %v1824 = vpack.c.bf16 %v1823, %v1823
        %v1825 = vld [vmem:[#allocation30] sm:$0xf]
        %v1826 = vld [vmem:[#allocation30 + $0x4] sm:$0xf]
        %v1827 = vld [vmem:[#allocation30 + $0x8] sm:$0xf]
        %v1828 = vld [vmem:[#allocation30 + $0xc] sm:$0xf]
        %v1829 = vld [vmem:[#allocation30 + $0x10] sm:$0xf]
        %v1830 = vld [vmem:[#allocation30 + $0x14] sm:$0xf]
        %v1831 = vld [vmem:[#allocation30 + $0x18] sm:$0xf]
        %v1832 = vld [vmem:[#allocation30 + $0x1c] sm:$0xf]
        %v1833 = vld [vmem:[#allocation31] sm:$0x1]
        %v1835 = vlaneseq
        %v1836 = vshrl.u32 %v1835, 7
        %v1837 = vsub.s32 0, %v1836
        %v1838 = vrot.slane %v1833, %v1837
        %v1848 = vunpack.c.l.b16 %v1825
        %v1849 = vunpack.c.l.b16 %v1826
        %v1850 = vunpack.c.l.b16 %v1827
        %v1851 = vunpack.c.l.b16 %v1828
        %v1852 = vunpack.c.l.b16 %v1829
        %v1853 = vunpack.c.l.b16 %v1830
        %v1854 = vunpack.c.l.b16 %v1831
        %v1855 = vunpack.c.l.b16 %v1832
        %v1856 = vpack.c.b16 %v1849, %v1848
        %v1857 = vpack.c.b16 %v1851, %v1850
        %v1858 = vpack.c.b16 %v1853, %v1852
        %v1859 = vpack.c.b16 %v1855, %v1854
        %vm1864 = vcmask 523264
        %v1866 = vsel %vm1864, %v1824, 0
        %1868 = vmatprep.subr.bf16.mxu0 0
        %1869 = vmatpush1.bf16.msra.mxu0 %v1856
        %1870 = vmatprep.subr.bf16.mxu0 0
        %1871 = vmatpush1.bf16.msra.mxu0 %v1857
        %1872 = vmatprep.subr.bf16.mxu0 0
        %1873 = vmatpush1.bf16.msra.mxu0 %v1858
        %1874 = vmatprep.subr.bf16.mxu0 0
        %1875 = vmatpush1.bf16.msra.mxu0 %v1859
        %1876 = vmatprep.subr.bf16.mxu0 0
        %1877 = vmatpush1.bf16.msra.mxu0 0
        %1878 = vmatprep.subr.bf16.mxu0 0
        %1879 = vmatpush1.bf16.msra.mxu0 0
        %1880 = vmatprep.subr.bf16.mxu0 0
        %1881 = vmatpush1.bf16.msra.mxu0 0
        %1882 = vmatprep.subr.bf16.mxu0 0
        %1883 = vmatpush1.bf16.msra.mxu0 0
        %1884 = vmatprep.subr.bf16.mxu0 0
        %1885 = vmatpush1.bf16.msra.mxu0 0
        %1886 = vmatprep.subr.bf16.mxu0 0
        %1887 = vmatpush1.bf16.msra.mxu0 0
        %1888 = vmatprep.subr.bf16.mxu0 0
        %1889 = vmatpush1.bf16.msra.mxu0 0
        %1890 = vmatprep.subr.bf16.mxu0 0
        %1891 = vmatpush1.bf16.msra.mxu0 0
        %1892 = vmatprep.subr.bf16.mxu0 0
        %1893 = vmatpush1.bf16.msra.mxu0 0
        %1894 = vmatprep.subr.bf16.mxu0 0
        %1895 = vmatpush1.bf16.msra.mxu0 0
        %1896 = vmatprep.subr.bf16.mxu0 0
        %1897 = vmatpush1.bf16.msra.mxu0 0
        %1898 = vmatprep.subr.bf16.mxu0 0
        %1899 = vmatpush1.bf16.msra.mxu0 0
        %1900 = vmatprep.mubr.bf16.mxu0 0
        %1901 = vmatmul.mubr.bf16.gmra.mrb[0].mxu0 %v1866
        %v1902 = vpop.f32.mrb[0].mxu0
        %v1903 = vadd.f32 %v1838, %v1902
        %v1904 = vpop.f32.mrb[0].mxu0
        %v1905 = vpop.f32.mrb[0].mxu0
        %v1906 = vpop.f32.mrb[0].mxu0
        %1907 = vdwg.mxu0
        %v1908 = vadd.f32 %v1755, %v1903
        %v1909 = vsel %vm1276, %v1908, 0.0
        %1910 = vadd.xlane.f32.xlu0 %v1909
        %v1911 = vpop.xlane.xlu0 %1910
        %v1912 = vmul.f32 %v1911, %v1729
        %v1913 = vsub.f32 %v1908, %v1912
        %v1914 = vmul.f32 %v1913, %v1913
        %v1915 = vsel %vm1276, %v1914, 0.0
        %1916 = vadd.xlane.f32.xlu0 %v1915
        %v1917 = vpop.xlane.xlu0 %1916
        %v1918 = vmul.f32 %v1917, %v1729
        %v1919 = vadd.f32 %v1918, 1e-05
        %v1920 = vrsqrt.pop %v1919
        %v1921 = vmul.f32 %v1913, %v1920
        %v1922 = vld [vmem:[#allocation33] sm:$0x1]
        %v1924 = vlaneseq
        %v1925 = vshrl.u32 %v1924, 7
        %v1926 = vsub.s32 0, %v1925
        %v1927 = vrot.slane %v1922, %v1926
        %v1929 = vmul.f32 %v1921, %v1927
        %v1930 = vld [vmem:[#allocation34] sm:$0x1]
        %v1932 = vlaneseq
        %v1933 = vshrl.u32 %v1932, 7
        %v1934 = vsub.s32 0, %v1933
        %v1935 = vrot.slane %v1930, %v1934
        %v1937 = vadd.f32 %v1929, %v1935
        %1938 = vst.msk [vmem:[%s969] sm:$0xff] %vm1276, %v1937
        %s1939 = sand.u32 %s515, 1
        %s1940 = scalar_lea.sflag [#allocation6], %s1939
        %s1941 = sand.u32 %s515, 1
        %s1942 = smul.addr %s1941, 8
        %s1943 = scalar_lea.vmem [#allocation36], %s1942
        // Predicated region
        $region185: #{tpu_custom_call.1} parent=99 // pred_check
          %p1944 = pneg %p525
        $region186: #{tpu_custom_call.1} parent=99 // pred_check_branch
          %1946 = sbr.rel (%p1944) target = $region188
        $region187: #{tpu_custom_call.1} parent=99 // pred_region
          %s1948 = ssub.s32 128, 128
          %1949 = vsyncadd %s1940, %s1948
          %s1950 = sadd.s32 %s56, %s55
          %s1951 = smul.addr %s1950, 128
          %s1952 = scalar_lea.hbm %s20, %s1951
          %s1954 = sshll.u32 %s1943, 4
          %s1955 = int_to_ptr.vmem [resolvable:$true] %s1954
          %1957 = dma.vmem_to_hbm [thread:$0]  %s1955, 128, %s1952, %s1940
        $region188: #{tpu_custom_call.1} parent=99 // pred_fallthru
          _
      $region100: #{tpu_custom_call.1} parent=5 // pred_fallthru
        _
      %p1958 = scmp.le.s32.totalorder 2, %s46
      // Predicated region
      $region189: #{tpu_custom_call.1} parent=5 // pred_check
        %p1959 = pneg %p1958
      $region190: #{tpu_custom_call.1} parent=5 // pred_check_branch
        %1961 = sbr.rel (%p1959) target = $region192
      $region191: #{tpu_custom_call.1} parent=5 // pred_region
        %s1962 = ssub.s32 %s46, 2
        // Predicated region
        $region193: #{tpu_custom_call.1} parent=191 // pred_check
          %p1963 = pneg %p531
        $region194: #{tpu_custom_call.1} parent=191 // pred_check_branch
          %1965 = sbr.rel (%p1963) target = $region196
        $region195: #{tpu_custom_call.1} parent=191 // pred_region
          %s1966 = sand.u32 %s516, 1
          %s1967 = scalar_lea.sflag [#allocation6], %s1966
          %s1968 = sand.u32 %s516, 1
          %s1969 = smul.addr %s1968, 8
          %s1970 = scalar_lea.vmem [#allocation36], %s1969
          %1971 = dma.done %s1967, 128
        $region196: #{tpu_custom_call.1} parent=191 // pred_fallthru
          _
      $region192: #{tpu_custom_call.1} parent=5 // pred_fallthru
        _
    $region6: #{tpu_custom_call.1} parent=1 // loop_footer
      %s50 = sadd.s32 1, %s46
    $region7: #{tpu_custom_call.1} parent=1 // loop_footer_branch
      %45 = sbr.rel target = $region3
    $region8: #{tpu_custom_call.1} parent=1 // loop_exit
      _
    %1972 = vsyncpa [#allocation5], 1
    %s1973 = scalar_lea.sflag [#allocation5], 1
    %1974 = vsyncpa %s1973, 1
    %1975 = vsyncpa [#allocation8], 1
    %s1976 = scalar_lea.sflag [#allocation8], 1
    %1977 = vsyncpa %s1976, 1
    %1978 = vsyncpa [#allocation11], 1
    %s1979 = scalar_lea.sflag [#allocation11], 1
    %1980 = vsyncpa %s1979, 1
    %1981 = vsyncpa [#allocation14], 1
    %1982 = vsyncpa [#allocation17], 1
    %1983 = vsyncpa [#allocation20], 1
    %1984 = vsyncpa [#allocation23], 1
    %1985 = vsyncpa [#allocation26], 1
    %1986 = vsyncpa [#allocation29], 1
    %1987 = vsyncpa [#allocation32], 1
    %1988 = vsyncpa [#allocation35], 1
    %1989 = vsyncpa [#allocation6], 1
    %s1990 = scalar_lea.sflag [#allocation6], 1
    %1991 = vsyncpa %s1990, 1

</llo_original>
